<compile_context>
chip_gen: v7x
topology: tpu7x:2x2x1
jax: 0.10.0
libtpu: 0.0.40
codegen_flags: <defaults>
</compile_context>

<pallas_src>
from functools import partial

import jax
import jax.numpy as jnp
from jax.experimental import pallas as pl
from jax.experimental.pallas import tpu as pltpu

LEAKY_ALPHA = 0.2


# ------------------- Fused kernel: projection + attention + gate, B_TILE batches -------- #
def gat_fused_kernel(feat_ref, adjm_ref, wpk_ref, bias_ref, hb_ref, out_ref, *,
                     b_tile, n_nodes, att_head, out_dim, in_dim, a_pad, compute_dtype):
    x = feat_ref[...]                                   # (b_tile*N, in_dim) f32
    xc = x.astype(compute_dtype)

    # One fused MXU pass against the packed weight: [h_all | gate_pre | asrc | adst]
    fused = jnp.dot(xc, wpk_ref[...], preferred_element_type=jnp.float32)
    h_all = fused[:, :in_dim]                                         # (b_tile*N, in_dim)
    gate_pre = fused[:, in_dim:2 * in_dim] + hb_ref[...]              # (b_tile*N, in_dim)
    asrc_all = fused[:, 2 * in_dim:2 * in_dim + a_pad]                # (b_tile*N, a_pad)
    adst_all = fused[:, 2 * in_dim + a_pad:2 * in_dim + 2 * a_pad]    # (b_tile*N, a_pad)

    h_c = h_all.astype(compute_dtype)                   # cast once, slice per head below

    batch_outs = []
    for bt in range(b_tile):
        r0 = bt * n_nodes
        asrc_b = asrc_all[r0:r0 + n_nodes, :]           # (N, a_pad)
        adst_bT = adst_all[r0:r0 + n_nodes, :].T        # (a_pad, N) tiny transpose, 1/batch
        adj_b = adjm_ref[bt]                            # (N, N) multiplicative f32 mask

        head_outs = []
        for a in range(att_head):
            attn = asrc_b[:, a:a + 1] + adst_bT[a:a + 1, :]             # (N, N) src_i + dst_j
            attn = jnp.where(attn >= 0.0, attn, LEAKY_ALPHA * attn)     # leaky_relu
            attn = jnp.tanh(attn)
            # softmax over neighbors: logits are tanh-bounded in [-1, 1]; masked entries are
            # multiplicative zeros (== exp(-999) in f32), so no row-max subtraction needed.
            e = jnp.exp(attn) * adj_b
            denom = jnp.maximum(jnp.sum(e, axis=-1, keepdims=True), 1e-30)
            p = e * pl.reciprocal(denom, approx=True)
            h_head = h_c[r0:r0 + n_nodes, a * out_dim:(a + 1) * out_dim]
            head_outs.append(jnp.dot(p.astype(compute_dtype), h_head,
                                     preferred_element_type=jnp.float32))
        batch_outs.append(jnp.concatenate(head_outs, axis=-1))          # (N, in_dim)

    f = jnp.concatenate(batch_outs, axis=0) + bias_ref[...]             # (b_tile*N, in_dim)

    # fused ELU + gated residual (second stage of the PyTorch module)
    elu = jnp.where(f > 0.0, f, jnp.exp(f) - 1.0)                       # F.elu, alpha=1
    gate = jax.nn.sigmoid(gate_pre)
    out_ref[...] = gate * elu + (1.0 - gate) * x


# --------------------------------------- Wrapper ---------------------------------------- #
def graph_attention_layer(feat_in, adj, W, b, w_src, w_dst, H_w, H_b, *,
                          att_head, out_dim, compute_dtype=jnp.float32, b_tile=None,
                          vmem_limit_bytes=64 * 1024 * 1024):
    B, N, in_dim = feat_in.shape
    assert in_dim == att_head * out_dim

    # Pick a batch tile: raise MXU row occupancy but keep >= 2 grid steps for v7x megacore.
    if b_tile is None:
        b_tile = 1
        for d in range(2, B + 1):
            if B % d == 0 and d * N <= 512 and (B // d) >= 2:
                b_tile = d
    assert B % b_tile == 0, "batch must be divisible by b_tile"

    # ---- parameter packing (plain JAX glue, constant-folded under jit) ----
    a_pad = ((att_head + 7) // 8) * 8
    # all heads of the projection in one matmul: columns grouped per head
    W_all = jnp.transpose(W, (1, 0, 2)).reshape(in_dim, att_head * out_dim)
    # associativity fold: asrc[:, a] = x @ (W[a] @ w_src[a, :, 0])
    Wsrc_fold = jnp.einsum('aio,ao->ia', W, w_src[..., 0])              # (in_dim, att_head)
    Wdst_fold = jnp.einsum('aio,ao->ia', W, w_dst[..., 0])
    pad = a_pad - att_head
    Wsrc_fold = jnp.pad(Wsrc_fold, ((0, 0), (0, pad)))
    Wdst_fold = jnp.pad(Wdst_fold, ((0, 0), (0, pad)))
    # single packed weight: [W_all | H_w^T | Wsrc_fold | Wdst_fold]
    W_packed = jnp.concatenate([W_all, H_w.T, Wsrc_fold, Wdst_fold],
                               axis=1).astype(compute_dtype)            # (in_dim, w_tot)
    w_tot = 2 * in_dim + 2 * a_pad

    bias_all = jnp.tile(b, att_head).reshape(1, in_dim)                 # same bias per head
    Hb2d = H_b.reshape(1, in_dim)
    # multiplicative mask, same semantics as reference masked_fill(mask=(1-adj)!=0, -999)
    adj_mask = (adj == 1.0).astype(jnp.float32)                         # (B, N, N)

    feat2 = feat_in.reshape(B * N, in_dim)                              # free wrapper reshape

    kernel = partial(gat_fused_kernel, b_tile=b_tile, n_nodes=N, att_head=att_head,
                     out_dim=out_dim, in_dim=in_dim, a_pad=a_pad,
                     compute_dtype=compute_dtype)

    out2 = pl.pallas_call(
        kernel,
        out_shape=jax.ShapeDtypeStruct((B * N, in_dim), jnp.float32),
        grid=(B // b_tile,),
        in_specs=[
            pl.BlockSpec((b_tile * N, in_dim), lambda i: (i, 0)),       # feat (flattened)
            pl.BlockSpec((b_tile, N, N), lambda i: (i, 0, 0)),          # adjacency mask
            pl.BlockSpec((in_dim, w_tot), lambda i: (0, 0)),            # packed weight
            pl.BlockSpec((1, in_dim), lambda i: (0, 0)),                # per-head bias
            pl.BlockSpec((1, in_dim), lambda i: (0, 0)),                # gate bias
        ],
        out_specs=pl.BlockSpec((b_tile * N, in_dim), lambda i: (i, 0)),
        compiler_params=pltpu.CompilerParams(
            dimension_semantics=("parallel",),
            vmem_limit_bytes=vmem_limit_bytes),
    )(feat2, adj_mask, W_packed, bias_all, Hb2d)

    return out2.reshape(B, N, in_dim)


# ----------------------------- Pure-JAX reference for checking -------------------------- #
def reference(feat_in, adj, W, b, w_src, w_dst, H_w, H_b, att_head, out_dim):
    B, N, in_dim = feat_in.shape
    h = jnp.einsum('bni,aio->bano', feat_in, W)
    asrc = jnp.einsum('bano,ao->ban', h, w_src[..., 0])
    adst = jnp.einsum('bano,ao->ban', h, w_dst[..., 0])
    attn = asrc[..., :, None] + adst[..., None, :]
    attn = jnp.where(attn >= 0, attn, LEAKY_ALPHA * attn)
    attn = jnp.tanh(attn)
    mask = (1.0 - adj[:, None, :, :]) != 0.0
    attn = jnp.where(mask, -999.0, attn)
    attn = jax.nn.softmax(attn, axis=-1)
    fo = jnp.einsum('banm,bamo->bano', attn, h) + b
    fo = jnp.transpose(fo, (0, 2, 1, 3)).reshape(B, N, in_dim)
    fo = jnp.where(fo > 0, fo, jnp.exp(fo) - 1.0)
    gate = jax.nn.sigmoid(feat_in @ H_w.T + H_b)
    return gate * fo + (1.0 - gate) * feat_in


if __name__ == "__main__":
    # Small, module-consistent shapes: in_dim == att_head * out_dim
    B, N = 4, 16
    att_head, out_dim = 4, 8
    in_dim = att_head * out_dim   # 32

    key = jax.random.PRNGKey(0)
    k_feat, k_adj, k_W, k_src, k_dst, k_Hw, k_Hb = jax.random.split(key, 7)

    feat_in = jax.random.normal(k_feat, (B, N, in_dim), dtype=jnp.float32)

    # deterministic binary adjacency with self-loops (no fully-isolated nodes)
    adj = (jax.random.uniform(k_adj, (B, N, N)) > 0.5).astype(jnp.float32)
    eye = jnp.eye(N, dtype=jnp.float32)[None]
    adj = jnp.clip(adj + eye, 0.0, 1.0)

    # deterministic "xavier-like" parameter init (synthetic, no checkpoint load)
    lim_W = (6.0 / (in_dim * out_dim + att_head * out_dim)) ** 0.5
    W = jax.random.uniform(k_W, (att_head, in_dim, out_dim),
                           minval=-lim_W, maxval=lim_W, dtype=jnp.float32)
    b = jnp.zeros((out_dim,), dtype=jnp.float32)
    lim_a = (6.0 / (out_dim + 1)) ** 0.5
    w_src = jax.random.uniform(k_src, (att_head, out_dim, 1),
                               minval=-lim_a, maxval=lim_a, dtype=jnp.float32)
    w_dst = jax.random.uniform(k_dst, (att_head, out_dim, 1),
                               minval=-lim_a, maxval=lim_a, dtype=jnp.float32)
    std_H = (2.0 / (in_dim + in_dim)) ** 0.5
    H_w = std_H * jax.random.normal(k_Hw, (in_dim, in_dim), dtype=jnp.float32)
    lim_b = 1.0 / (in_dim ** 0.5)
    H_b = jax.random.uniform(k_Hb, (in_dim,), minval=-lim_b, maxval=lim_b,
                             dtype=jnp.float32)

    out = graph_attention_layer(feat_in, adj, W, b, w_src, w_dst, H_w, H_b,
                                att_head=att_head, out_dim=out_dim,
                                compute_dtype=jnp.float32)
    out = jax.block_until_ready(out)

    ref = reference(feat_in, adj, W, b, w_src, w_dst, H_w, H_b, att_head, out_dim)
    assert out.shape == (B, N, in_dim)
    # tolerance covers the approx EUP reciprocal in the softmax denom and the
    # associativity-folded score matmuls
    assert jnp.allclose(out, ref, rtol=5e-3, atol=5e-3), "mismatch vs JAX reference"

    print("KERNEL_OK")
</pallas_src>

<mosaic_0001>
module attributes {stable_mosaic.version = 11 : i64} {
  func.func @gat_fused_kernel(%arg0: i32, %arg1: memref<32x32xf32, #tpu.memory_space<vmem>>, %arg2: memref<2x16x16xf32, #tpu.memory_space<vmem>>, %arg3: memref<32x80xf32, #tpu.memory_space<vmem>>, %arg4: memref<1x32xf32, #tpu.memory_space<vmem>>, %arg5: memref<1x32xf32, #tpu.memory_space<vmem>>, %arg6: memref<32x32xf32, #tpu.memory_space<vmem>>) attributes {dimension_semantics = [#tpu.dimension_semantics<parallel>], iteration_bounds = array<i64: 2>, scalar_prefetch = 0 : i64, scratch_operands = 0 : i64, tpu.core_type = #tpu.core_type<tc>, window_params = [{transform_indices = @transform_0, window_bounds = array<i64: 32, 32>}, {transform_indices = @transform_1, window_bounds = array<i64: 2, 16, 16>}, {pipeline_mode = #tpu.pipeline_mode<synchronous>, transform_indices = @transform_2, window_bounds = array<i64: 32, 80>}, {pipeline_mode = #tpu.pipeline_mode<synchronous>, transform_indices = @transform_3, window_bounds = array<i64: 1, 32>}, {pipeline_mode = #tpu.pipeline_mode<synchronous>, transform_indices = @transform_4, window_bounds = array<i64: 1, 32>}, {transform_indices = @transform_5, window_bounds = array<i64: 32, 32>}]} {
    %c0 = arith.constant 0 : index
    %c0_0 = arith.constant 0 : index
    %0 = vector.load %arg1[%c0, %c0_0] : memref<32x32xf32, #tpu.memory_space<vmem>>, vector<32x32xf32>
    %c0_1 = arith.constant 0 : index
    %c0_2 = arith.constant 0 : index
    %1 = vector.load %arg3[%c0_1, %c0_2] : memref<32x80xf32, #tpu.memory_space<vmem>>, vector<32x80xf32>
    %cst = arith.constant dense<0.000000e+00> : vector<32x80xf32>
    %2 = tpu.matmul %0, %1, %cst {dimension_numbers = #tpu.dot_dimension_numbers<[1], [0], [0], [1], [0, 0, 1, 1], [], []>} : vector<32x32xf32>, vector<32x80xf32>, vector<32x80xf32> -> vector<32x80xf32>
    %3 = vector.extract_strided_slice %2 {offsets = [0, 0], sizes = [32, 32], strides = [1, 1]} : vector<32x80xf32> to vector<32x32xf32>
    %4 = vector.extract_strided_slice %2 {offsets = [0, 32], sizes = [32, 32], strides = [1, 1]} : vector<32x80xf32> to vector<32x32xf32>
    %c0_3 = arith.constant 0 : index
    %c0_4 = arith.constant 0 : index
    %5 = vector.load %arg5[%c0_3, %c0_4] : memref<1x32xf32, #tpu.memory_space<vmem>>, vector<1x32xf32>
    %6 = vector.broadcast %5 : vector<1x32xf32> to vector<32x32xf32>
    %7 = arith.addf %4, %6 : vector<32x32xf32>
    %8 = vector.extract_strided_slice %2 {offsets = [0, 64], sizes = [32, 8], strides = [1, 1]} : vector<32x80xf32> to vector<32x8xf32>
    %9 = vector.extract_strided_slice %2 {offsets = [0, 72], sizes = [32, 8], strides = [1, 1]} : vector<32x80xf32> to vector<32x8xf32>
    %10 = vector.extract_strided_slice %8 {offsets = [0, 0], sizes = [16, 8], strides = [1, 1]} : vector<32x8xf32> to vector<16x8xf32>
    %11 = vector.extract_strided_slice %9 {offsets = [0, 0], sizes = [16, 8], strides = [1, 1]} : vector<32x8xf32> to vector<16x8xf32>
    %12 = tpu.transpose %11, [1, 0] : vector<16x8xf32> -> vector<8x16xf32>
    %c0_5 = arith.constant 0 : index
    %c0_6 = arith.constant 0 : index
    %c0_7 = arith.constant 0 : index
    %13 = vector.load %arg2[%c0_5, %c0_6, %c0_7] : memref<2x16x16xf32, #tpu.memory_space<vmem>>, vector<1x16x16xf32>
    %14 = vector.shape_cast %13 : vector<1x16x16xf32> to vector<16x16xf32>
    %15 = vector.extract_strided_slice %10 {offsets = [0, 0], sizes = [16, 1], strides = [1, 1]} : vector<16x8xf32> to vector<16x1xf32>
    %16 = vector.extract_strided_slice %12 {offsets = [0, 0], sizes = [1, 16], strides = [1, 1]} : vector<8x16xf32> to vector<1x16xf32>
    %17 = vector.broadcast %15 : vector<16x1xf32> to vector<16x16xf32>
    %18 = vector.broadcast %16 : vector<1x16xf32> to vector<16x16xf32>
    %19 = arith.addf %17, %18 : vector<16x16xf32>
    %cst_8 = arith.constant 0.000000e+00 : f32
    %20 = vector.broadcast %cst_8 : f32 to vector<16x16xf32>
    %21 = arith.cmpf oge, %19, %20 : vector<16x16xf32>
    %cst_9 = arith.constant 2.000000e-01 : f32
    %22 = vector.broadcast %cst_9 : f32 to vector<16x16xf32>
    %23 = arith.mulf %22, %19 : vector<16x16xf32>
    %24 = arith.select %21, %19, %23 : vector<16x16xi1>, vector<16x16xf32>
    %25 = math.tanh %24 : vector<16x16xf32>
    %26 = math.exp %25 : vector<16x16xf32>
    %27 = arith.mulf %26, %14 : vector<16x16xf32>
    %cst_10 = arith.constant dense<0.000000e+00> : vector<16xf32>
    %28 = vector.multi_reduction <add>, %27, %cst_10 [1] : vector<16x16xf32> to vector<16xf32>
    %29 = vector.shape_cast %28 : vector<16xf32> to vector<16x1xf32>
    %cst_11 = arith.constant 1.000000e-30 : f32
    %30 = vector.broadcast %cst_11 : f32 to vector<16x1xf32>
    %31 = arith.maximumf %29, %30 : vector<16x1xf32>
    %32 = tpu.reciprocal %31 {approx = true} : vector<16x1xf32> -> vector<16x1xf32>
    %33 = vector.broadcast %32 : vector<16x1xf32> to vector<16x16xf32>
    %34 = arith.mulf %27, %33 : vector<16x16xf32>
    %35 = vector.extract_strided_slice %3 {offsets = [0, 0], sizes = [16, 8], strides = [1, 1]} : vector<32x32xf32> to vector<16x8xf32>
    %cst_12 = arith.constant dense<0.000000e+00> : vector<16x8xf32>
    %36 = tpu.matmul %34, %35, %cst_12 {dimension_numbers = #tpu.dot_dimension_numbers<[1], [0], [0], [1], [0, 0, 1, 1], [], []>} : vector<16x16xf32>, vector<16x8xf32>, vector<16x8xf32> -> vector<16x8xf32>
    %37 = vector.extract_strided_slice %10 {offsets = [0, 1], sizes = [16, 1], strides = [1, 1]} : vector<16x8xf32> to vector<16x1xf32>
    %38 = vector.extract_strided_slice %12 {offsets = [1, 0], sizes = [1, 16], strides = [1, 1]} : vector<8x16xf32> to vector<1x16xf32>
    %39 = vector.broadcast %37 : vector<16x1xf32> to vector<16x16xf32>
    %40 = vector.broadcast %38 : vector<1x16xf32> to vector<16x16xf32>
    %41 = arith.addf %39, %40 : vector<16x16xf32>
    %cst_13 = arith.constant 0.000000e+00 : f32
    %42 = vector.broadcast %cst_13 : f32 to vector<16x16xf32>
    %43 = arith.cmpf oge, %41, %42 : vector<16x16xf32>
    %cst_14 = arith.constant 2.000000e-01 : f32
    %44 = vector.broadcast %cst_14 : f32 to vector<16x16xf32>
    %45 = arith.mulf %44, %41 : vector<16x16xf32>
    %46 = arith.select %43, %41, %45 : vector<16x16xi1>, vector<16x16xf32>
    %47 = math.tanh %46 : vector<16x16xf32>
    %48 = math.exp %47 : vector<16x16xf32>
    %49 = arith.mulf %48, %14 : vector<16x16xf32>
    %cst_15 = arith.constant dense<0.000000e+00> : vector<16xf32>
    %50 = vector.multi_reduction <add>, %49, %cst_15 [1] : vector<16x16xf32> to vector<16xf32>
    %51 = vector.shape_cast %50 : vector<16xf32> to vector<16x1xf32>
    %cst_16 = arith.constant 1.000000e-30 : f32
    %52 = vector.broadcast %cst_16 : f32 to vector<16x1xf32>
    %53 = arith.maximumf %51, %52 : vector<16x1xf32>
    %54 = tpu.reciprocal %53 {approx = true} : vector<16x1xf32> -> vector<16x1xf32>
    %55 = vector.broadcast %54 : vector<16x1xf32> to vector<16x16xf32>
    %56 = arith.mulf %49, %55 : vector<16x16xf32>
    %57 = vector.extract_strided_slice %3 {offsets = [0, 8], sizes = [16, 8], strides = [1, 1]} : vector<32x32xf32> to vector<16x8xf32>
    %cst_17 = arith.constant dense<0.000000e+00> : vector<16x8xf32>
    %58 = tpu.matmul %56, %57, %cst_17 {dimension_numbers = #tpu.dot_dimension_numbers<[1], [0], [0], [1], [0, 0, 1, 1], [], []>} : vector<16x16xf32>, vector<16x8xf32>, vector<16x8xf32> -> vector<16x8xf32>
    %59 = vector.extract_strided_slice %10 {offsets = [0, 2], sizes = [16, 1], strides = [1, 1]} : vector<16x8xf32> to vector<16x1xf32>
    %60 = vector.extract_strided_slice %12 {offsets = [2, 0], sizes = [1, 16], strides = [1, 1]} : vector<8x16xf32> to vector<1x16xf32>
    %61 = vector.broadcast %59 : vector<16x1xf32> to vector<16x16xf32>
    %62 = vector.broadcast %60 : vector<1x16xf32> to vector<16x16xf32>
    %63 = arith.addf %61, %62 : vector<16x16xf32>
    %cst_18 = arith.constant 0.000000e+00 : f32
    %64 = vector.broadcast %cst_18 : f32 to vector<16x16xf32>
    %65 = arith.cmpf oge, %63, %64 : vector<16x16xf32>
    %cst_19 = arith.constant 2.000000e-01 : f32
    %66 = vector.broadcast %cst_19 : f32 to vector<16x16xf32>
    %67 = arith.mulf %66, %63 : vector<16x16xf32>
    %68 = arith.select %65, %63, %67 : vector<16x16xi1>, vector<16x16xf32>
    %69 = math.tanh %68 : vector<16x16xf32>
    %70 = math.exp %69 : vector<16x16xf32>
    %71 = arith.mulf %70, %14 : vector<16x16xf32>
    %cst_20 = arith.constant dense<0.000000e+00> : vector<16xf32>
    %72 = vector.multi_reduction <add>, %71, %cst_20 [1] : vector<16x16xf32> to vector<16xf32>
    %73 = vector.shape_cast %72 : vector<16xf32> to vector<16x1xf32>
    %cst_21 = arith.constant 1.000000e-30 : f32
    %74 = vector.broadcast %cst_21 : f32 to vector<16x1xf32>
    %75 = arith.maximumf %73, %74 : vector<16x1xf32>
    %76 = tpu.reciprocal %75 {approx = true} : vector<16x1xf32> -> vector<16x1xf32>
    %77 = vector.broadcast %76 : vector<16x1xf32> to vector<16x16xf32>
    %78 = arith.mulf %71, %77 : vector<16x16xf32>
    %79 = vector.extract_strided_slice %3 {offsets = [0, 16], sizes = [16, 8], strides = [1, 1]} : vector<32x32xf32> to vector<16x8xf32>
    %cst_22 = arith.constant dense<0.000000e+00> : vector<16x8xf32>
    %80 = tpu.matmul %78, %79, %cst_22 {dimension_numbers = #tpu.dot_dimension_numbers<[1], [0], [0], [1], [0, 0, 1, 1], [], []>} : vector<16x16xf32>, vector<16x8xf32>, vector<16x8xf32> -> vector<16x8xf32>
    %81 = vector.extract_strided_slice %10 {offsets = [0, 3], sizes = [16, 1], strides = [1, 1]} : vector<16x8xf32> to vector<16x1xf32>
    %82 = vector.extract_strided_slice %12 {offsets = [3, 0], sizes = [1, 16], strides = [1, 1]} : vector<8x16xf32> to vector<1x16xf32>
    %83 = vector.broadcast %81 : vector<16x1xf32> to vector<16x16xf32>
    %84 = vector.broadcast %82 : vector<1x16xf32> to vector<16x16xf32>
    %85 = arith.addf %83, %84 : vector<16x16xf32>
    %cst_23 = arith.constant 0.000000e+00 : f32
    %86 = vector.broadcast %cst_23 : f32 to vector<16x16xf32>
    %87 = arith.cmpf oge, %85, %86 : vector<16x16xf32>
    %cst_24 = arith.constant 2.000000e-01 : f32
    %88 = vector.broadcast %cst_24 : f32 to vector<16x16xf32>
    %89 = arith.mulf %88, %85 : vector<16x16xf32>
    %90 = arith.select %87, %85, %89 : vector<16x16xi1>, vector<16x16xf32>
    %91 = math.tanh %90 : vector<16x16xf32>
    %92 = math.exp %91 : vector<16x16xf32>
    %93 = arith.mulf %92, %14 : vector<16x16xf32>
    %cst_25 = arith.constant dense<0.000000e+00> : vector<16xf32>
    %94 = vector.multi_reduction <add>, %93, %cst_25 [1] : vector<16x16xf32> to vector<16xf32>
    %95 = vector.shape_cast %94 : vector<16xf32> to vector<16x1xf32>
    %cst_26 = arith.constant 1.000000e-30 : f32
    %96 = vector.broadcast %cst_26 : f32 to vector<16x1xf32>
    %97 = arith.maximumf %95, %96 : vector<16x1xf32>
    %98 = tpu.reciprocal %97 {approx = true} : vector<16x1xf32> -> vector<16x1xf32>
    %99 = vector.broadcast %98 : vector<16x1xf32> to vector<16x16xf32>
    %100 = arith.mulf %93, %99 : vector<16x16xf32>
    %101 = vector.extract_strided_slice %3 {offsets = [0, 24], sizes = [16, 8], strides = [1, 1]} : vector<32x32xf32> to vector<16x8xf32>
    %cst_27 = arith.constant dense<0.000000e+00> : vector<16x8xf32>
    %102 = tpu.matmul %100, %101, %cst_27 {dimension_numbers = #tpu.dot_dimension_numbers<[1], [0], [0], [1], [0, 0, 1, 1], [], []>} : vector<16x16xf32>, vector<16x8xf32>, vector<16x8xf32> -> vector<16x8xf32>
    %103 = tpu.concatenate %36, %58, %80, %102 in 1 : vector<16x8xf32>, vector<16x8xf32>, vector<16x8xf32>, vector<16x8xf32> -> vector<16x32xf32>
    %104 = vector.extract_strided_slice %8 {offsets = [16, 0], sizes = [16, 8], strides = [1, 1]} : vector<32x8xf32> to vector<16x8xf32>
    %105 = vector.extract_strided_slice %9 {offsets = [16, 0], sizes = [16, 8], strides = [1, 1]} : vector<32x8xf32> to vector<16x8xf32>
    %106 = tpu.transpose %105, [1, 0] : vector<16x8xf32> -> vector<8x16xf32>
    %c1 = arith.constant 1 : index
    %c0_28 = arith.constant 0 : index
    %c0_29 = arith.constant 0 : index
    %107 = vector.load %arg2[%c1, %c0_28, %c0_29] : memref<2x16x16xf32, #tpu.memory_space<vmem>>, vector<1x16x16xf32>
    %108 = vector.shape_cast %107 : vector<1x16x16xf32> to vector<16x16xf32>
    %109 = vector.extract_strided_slice %104 {offsets = [0, 0], sizes = [16, 1], strides = [1, 1]} : vector<16x8xf32> to vector<16x1xf32>
    %110 = vector.extract_strided_slice %106 {offsets = [0, 0], sizes = [1, 16], strides = [1, 1]} : vector<8x16xf32> to vector<1x16xf32>
    %111 = vector.broadcast %109 : vector<16x1xf32> to vector<16x16xf32>
    %112 = vector.broadcast %110 : vector<1x16xf32> to vector<16x16xf32>
    %113 = arith.addf %111, %112 : vector<16x16xf32>
    %cst_30 = arith.constant 0.000000e+00 : f32
    %114 = vector.broadcast %cst_30 : f32 to vector<16x16xf32>
    %115 = arith.cmpf oge, %113, %114 : vector<16x16xf32>
    %cst_31 = arith.constant 2.000000e-01 : f32
    %116 = vector.broadcast %cst_31 : f32 to vector<16x16xf32>
    %117 = arith.mulf %116, %113 : vector<16x16xf32>
    %118 = arith.select %115, %113, %117 : vector<16x16xi1>, vector<16x16xf32>
    %119 = math.tanh %118 : vector<16x16xf32>
    %120 = math.exp %119 : vector<16x16xf32>
    %121 = arith.mulf %120, %108 : vector<16x16xf32>
    %cst_32 = arith.constant dense<0.000000e+00> : vector<16xf32>
    %122 = vector.multi_reduction <add>, %121, %cst_32 [1] : vector<16x16xf32> to vector<16xf32>
    %123 = vector.shape_cast %122 : vector<16xf32> to vector<16x1xf32>
    %cst_33 = arith.constant 1.000000e-30 : f32
    %124 = vector.broadcast %cst_33 : f32 to vector<16x1xf32>
    %125 = arith.maximumf %123, %124 : vector<16x1xf32>
    %126 = tpu.reciprocal %125 {approx = true} : vector<16x1xf32> -> vector<16x1xf32>
    %127 = vector.broadcast %126 : vector<16x1xf32> to vector<16x16xf32>
    %128 = arith.mulf %121, %127 : vector<16x16xf32>
    %129 = vector.extract_strided_slice %3 {offsets = [16, 0], sizes = [16, 8], strides = [1, 1]} : vector<32x32xf32> to vector<16x8xf32>
    %cst_34 = arith.constant dense<0.000000e+00> : vector<16x8xf32>
    %130 = tpu.matmul %128, %129, %cst_34 {dimension_numbers = #tpu.dot_dimension_numbers<[1], [0], [0], [1], [0, 0, 1, 1], [], []>} : vector<16x16xf32>, vector<16x8xf32>, vector<16x8xf32> -> vector<16x8xf32>
    %131 = vector.extract_strided_slice %104 {offsets = [0, 1], sizes = [16, 1], strides = [1, 1]} : vector<16x8xf32> to vector<16x1xf32>
    %132 = vector.extract_strided_slice %106 {offsets = [1, 0], sizes = [1, 16], strides = [1, 1]} : vector<8x16xf32> to vector<1x16xf32>
    %133 = vector.broadcast %131 : vector<16x1xf32> to vector<16x16xf32>
    %134 = vector.broadcast %132 : vector<1x16xf32> to vector<16x16xf32>
    %135 = arith.addf %133, %134 : vector<16x16xf32>
    %cst_35 = arith.constant 0.000000e+00 : f32
    %136 = vector.broadcast %cst_35 : f32 to vector<16x16xf32>
    %137 = arith.cmpf oge, %135, %136 : vector<16x16xf32>
    %cst_36 = arith.constant 2.000000e-01 : f32
    %138 = vector.broadcast %cst_36 : f32 to vector<16x16xf32>
    %139 = arith.mulf %138, %135 : vector<16x16xf32>
    %140 = arith.select %137, %135, %139 : vector<16x16xi1>, vector<16x16xf32>
    %141 = math.tanh %140 : vector<16x16xf32>
    %142 = math.exp %141 : vector<16x16xf32>
    %143 = arith.mulf %142, %108 : vector<16x16xf32>
    %cst_37 = arith.constant dense<0.000000e+00> : vector<16xf32>
    %144 = vector.multi_reduction <add>, %143, %cst_37 [1] : vector<16x16xf32> to vector<16xf32>
    %145 = vector.shape_cast %144 : vector<16xf32> to vector<16x1xf32>
    %cst_38 = arith.constant 1.000000e-30 : f32
    %146 = vector.broadcast %cst_38 : f32 to vector<16x1xf32>
    %147 = arith.maximumf %145, %146 : vector<16x1xf32>
    %148 = tpu.reciprocal %147 {approx = true} : vector<16x1xf32> -> vector<16x1xf32>
    %149 = vector.broadcast %148 : vector<16x1xf32> to vector<16x16xf32>
    %150 = arith.mulf %143, %149 : vector<16x16xf32>
    %151 = vector.extract_strided_slice %3 {offsets = [16, 8], sizes = [16, 8], strides = [1, 1]} : vector<32x32xf32> to vector<16x8xf32>
    %cst_39 = arith.constant dense<0.000000e+00> : vector<16x8xf32>
    %152 = tpu.matmul %150, %151, %cst_39 {dimension_numbers = #tpu.dot_dimension_numbers<[1], [0], [0], [1], [0, 0, 1, 1], [], []>} : vector<16x16xf32>, vector<16x8xf32>, vector<16x8xf32> -> vector<16x8xf32>
    %153 = vector.extract_strided_slice %104 {offsets = [0, 2], sizes = [16, 1], strides = [1, 1]} : vector<16x8xf32> to vector<16x1xf32>
    %154 = vector.extract_strided_slice %106 {offsets = [2, 0], sizes = [1, 16], strides = [1, 1]} : vector<8x16xf32> to vector<1x16xf32>
    %155 = vector.broadcast %153 : vector<16x1xf32> to vector<16x16xf32>
    %156 = vector.broadcast %154 : vector<1x16xf32> to vector<16x16xf32>
    %157 = arith.addf %155, %156 : vector<16x16xf32>
    %cst_40 = arith.constant 0.000000e+00 : f32
    %158 = vector.broadcast %cst_40 : f32 to vector<16x16xf32>
    %159 = arith.cmpf oge, %157, %158 : vector<16x16xf32>
    %cst_41 = arith.constant 2.000000e-01 : f32
    %160 = vector.broadcast %cst_41 : f32 to vector<16x16xf32>
    %161 = arith.mulf %160, %157 : vector<16x16xf32>
    %162 = arith.select %159, %157, %161 : vector<16x16xi1>, vector<16x16xf32>
    %163 = math.tanh %162 : vector<16x16xf32>
    %164 = math.exp %163 : vector<16x16xf32>
    %165 = arith.mulf %164, %108 : vector<16x16xf32>
    %cst_42 = arith.constant dense<0.000000e+00> : vector<16xf32>
    %166 = vector.multi_reduction <add>, %165, %cst_42 [1] : vector<16x16xf32> to vector<16xf32>
    %167 = vector.shape_cast %166 : vector<16xf32> to vector<16x1xf32>
    %cst_43 = arith.constant 1.000000e-30 : f32
    %168 = vector.broadcast %cst_43 : f32 to vector<16x1xf32>
    %169 = arith.maximumf %167, %168 : vector<16x1xf32>
    %170 = tpu.reciprocal %169 {approx = true} : vector<16x1xf32> -> vector<16x1xf32>
    %171 = vector.broadcast %170 : vector<16x1xf32> to vector<16x16xf32>
    %172 = arith.mulf %165, %171 : vector<16x16xf32>
    %173 = vector.extract_strided_slice %3 {offsets = [16, 16], sizes = [16, 8], strides = [1, 1]} : vector<32x32xf32> to vector<16x8xf32>
    %cst_44 = arith.constant dense<0.000000e+00> : vector<16x8xf32>
    %174 = tpu.matmul %172, %173, %cst_44 {dimension_numbers = #tpu.dot_dimension_numbers<[1], [0], [0], [1], [0, 0, 1, 1], [], []>} : vector<16x16xf32>, vector<16x8xf32>, vector<16x8xf32> -> vector<16x8xf32>
    %175 = vector.extract_strided_slice %104 {offsets = [0, 3], sizes = [16, 1], strides = [1, 1]} : vector<16x8xf32> to vector<16x1xf32>
    %176 = vector.extract_strided_slice %106 {offsets = [3, 0], sizes = [1, 16], strides = [1, 1]} : vector<8x16xf32> to vector<1x16xf32>
    %177 = vector.broadcast %175 : vector<16x1xf32> to vector<16x16xf32>
    %178 = vector.broadcast %176 : vector<1x16xf32> to vector<16x16xf32>
    %179 = arith.addf %177, %178 : vector<16x16xf32>
    %cst_45 = arith.constant 0.000000e+00 : f32
    %180 = vector.broadcast %cst_45 : f32 to vector<16x16xf32>
    %181 = arith.cmpf oge, %179, %180 : vector<16x16xf32>
    %cst_46 = arith.constant 2.000000e-01 : f32
    %182 = vector.broadcast %cst_46 : f32 to vector<16x16xf32>
    %183 = arith.mulf %182, %179 : vector<16x16xf32>
    %184 = arith.select %181, %179, %183 : vector<16x16xi1>, vector<16x16xf32>
    %185 = math.tanh %184 : vector<16x16xf32>
    %186 = math.exp %185 : vector<16x16xf32>
    %187 = arith.mulf %186, %108 : vector<16x16xf32>
    %cst_47 = arith.constant dense<0.000000e+00> : vector<16xf32>
    %188 = vector.multi_reduction <add>, %187, %cst_47 [1] : vector<16x16xf32> to vector<16xf32>
    %189 = vector.shape_cast %188 : vector<16xf32> to vector<16x1xf32>
    %cst_48 = arith.constant 1.000000e-30 : f32
    %190 = vector.broadcast %cst_48 : f32 to vector<16x1xf32>
    %191 = arith.maximumf %189, %190 : vector<16x1xf32>
    %192 = tpu.reciprocal %191 {approx = true} : vector<16x1xf32> -> vector<16x1xf32>
    %193 = vector.broadcast %192 : vector<16x1xf32> to vector<16x16xf32>
    %194 = arith.mulf %187, %193 : vector<16x16xf32>
    %195 = vector.extract_strided_slice %3 {offsets = [16, 24], sizes = [16, 8], strides = [1, 1]} : vector<32x32xf32> to vector<16x8xf32>
    %cst_49 = arith.constant dense<0.000000e+00> : vector<16x8xf32>
    %196 = tpu.matmul %194, %195, %cst_49 {dimension_numbers = #tpu.dot_dimension_numbers<[1], [0], [0], [1], [0, 0, 1, 1], [], []>} : vector<16x16xf32>, vector<16x8xf32>, vector<16x8xf32> -> vector<16x8xf32>
    %197 = tpu.concatenate %130, %152, %174, %196 in 1 : vector<16x8xf32>, vector<16x8xf32>, vector<16x8xf32>, vector<16x8xf32> -> vector<16x32xf32>
    %198 = tpu.concatenate %103, %197 in 0 : vector<16x32xf32>, vector<16x32xf32> -> vector<32x32xf32>
    %c0_50 = arith.constant 0 : index
    %c0_51 = arith.constant 0 : index
    %199 = vector.load %arg4[%c0_50, %c0_51] : memref<1x32xf32, #tpu.memory_space<vmem>>, vector<1x32xf32>
    %200 = vector.broadcast %199 : vector<1x32xf32> to vector<32x32xf32>
    %201 = arith.addf %198, %200 : vector<32x32xf32>
    %cst_52 = arith.constant 0.000000e+00 : f32
    %202 = vector.broadcast %cst_52 : f32 to vector<32x32xf32>
    %203 = arith.cmpf ogt, %201, %202 : vector<32x32xf32>
    %204 = math.exp %201 : vector<32x32xf32>
    %cst_53 = arith.constant 1.000000e+00 : f32
    %205 = vector.broadcast %cst_53 : f32 to vector<32x32xf32>
    %206 = arith.subf %204, %205 : vector<32x32xf32>
    %207 = arith.select %203, %201, %206 : vector<32x32xi1>, vector<32x32xf32>
    %208 = arith.negf %7 : vector<32x32xf32>
    %209 = math.exp %208 : vector<32x32xf32>
    %cst_54 = arith.constant 1.000000e+00 : f32
    %210 = vector.broadcast %cst_54 : f32 to vector<32x32xf32>
    %211 = arith.addf %210, %209 : vector<32x32xf32>
    %212 = arith.divf %210, %211 : vector<32x32xf32>
    %213 = arith.mulf %212, %207 : vector<32x32xf32>
    %cst_55 = arith.constant 1.000000e+00 : f32
    %214 = vector.broadcast %cst_55 : f32 to vector<32x32xf32>
    %215 = arith.subf %214, %212 : vector<32x32xf32>
    %216 = arith.mulf %215, %0 : vector<32x32xf32>
    %217 = arith.addf %213, %216 : vector<32x32xf32>
    %c0_56 = arith.constant 0 : index
    %c0_57 = arith.constant 0 : index
    %218 = vector.load %arg6[%c0_56, %c0_57] : memref<32x32xf32, #tpu.memory_space<vmem>>, vector<32x32xf32>
    tpu.vector_store %arg6[%c0_56, %c0_57], %217 {strides = array<i32>} : memref<32x32xf32, #tpu.memory_space<vmem>>, vector<32x32xf32>,
    return
  }
  func.func @transform_0(%arg0: i32) -> (i32, i32) {
    %c0_i32 = arith.constant 0 : i32
    %c0_i32_0 = arith.constant 0 : i32
    return %arg0, %c0_i32 : i32, i32
  }
  func.func @transform_1(%arg0: i32) -> (i32, i32, i32) {
    %c0_i32 = arith.constant 0 : i32
    %c0_i32_0 = arith.constant 0 : i32
    %c0_i32_1 = arith.constant 0 : i32
    return %arg0, %c0_i32, %c0_i32_0 : i32, i32, i32
  }
  func.func @transform_2(%arg0: i32) -> (i32, i32) {
    %c0_i32 = arith.constant 0 : i32
    %c0_i32_0 = arith.constant 0 : i32
    %c0_i32_1 = arith.constant 0 : i32
    return %c0_i32, %c0_i32_0 : i32, i32
  }
  func.func @transform_3(%arg0: i32) -> (i32, i32) {
    %c0_i32 = arith.constant 0 : i32
    %c0_i32_0 = arith.constant 0 : i32
    %c0_i32_1 = arith.constant 0 : i32
    return %c0_i32, %c0_i32_0 : i32, i32
  }
  func.func @transform_4(%arg0: i32) -> (i32, i32) {
    %c0_i32 = arith.constant 0 : i32
    %c0_i32_0 = arith.constant 0 : i32
    %c0_i32_1 = arith.constant 0 : i32
    return %c0_i32, %c0_i32_0 : i32, i32
  }
  func.func @transform_5(%arg0: i32) -> (i32, i32) {
    %c0_i32 = arith.constant 0 : i32
    %c0_i32_0 = arith.constant 0 : i32
    return %arg0, %c0_i32 : i32, i32
  }
}

</mosaic_0001>

<llo_original>
// kernel: tpu_custom_call.1
$region0: #{tpu_custom_call.1}
  #allocation0 [shape = 'u32[]', space=smem, size = 0x4, offset = 0x4, fixed_abs, tag = 'smem constant byte address 0x4 - core index']
  #allocation1 [shape = 'u32[144,128]{1,0:T(1,128)}', space=vmem, size = 0x12000, scoped, tag = 'internal scratch']
  %s0 = inlined_call_operand.hbm [shape: f32[64,32], index: 0, kind: input, shape index: {}]
  %s1 = inlined_call_operand.hbm [shape: f32[4,16,16], index: 1, kind: input, shape index: {}]
  %s2 = inlined_call_operand.hbm [shape: f32[32,80], index: 2, kind: input, shape index: {}]
  %s3 = inlined_call_operand.hbm [shape: f32[1,32], index: 3, kind: input, shape index: {}]
  %s4 = inlined_call_operand.hbm [shape: f32[1,32], index: 4, kind: input, shape index: {}]
  %s5 = inlined_call_operand.hbm [shape: f32[64,32], index: 5, kind: output, shape index: {}]
  %s6 = sld [smem:[#allocation0]]
  $region73: #{tpu_custom_call.1} parent=0
    _
  %s8 = ssub.s32 1, %s6
  %s9 = scalar_select 0, %s8, %s6
  $region1: #{tpu_custom_call.1} parent=0
    #allocation2 [shape = 'u8[32768]{0}', space=vmem, size = 0x8000, scoped, tag = 'input window, operand 0']
    #allocation3 [shape = 's32[2]{0}', space=sflag, size = 0x8, scoped, tag = 'scoped memory for tpu_custom_call.1']
    #allocation4 [shape = 's32[2]{0}', space=sflag, size = 0x8, scoped, tag = 'scoped memory for tpu_custom_call.1']
    #allocation5 [shape = 'u8[32768]{0}', space=vmem, size = 0x8000, scoped, tag = 'input window, operand 1']
    #allocation6 [shape = 's32[2]{0}', space=sflag, size = 0x8, scoped, tag = 'scoped memory for tpu_custom_call.1']
    #allocation7 [shape = 'u8[16384]{0}', space=vmem, size = 0x4000, scoped, tag = 'input window, operand 2, single buffered']
    #allocation8 [shape = 'u8[512]{0}', space=vmem, size = 0x400, scoped, tag = 'input window, operand 3, single buffered']
    #allocation9 [shape = 's32[1]{0}', space=sflag, size = 0x4, scoped, tag = 'scoped memory for tpu_custom_call.1']
    #allocation10 [shape = 'u8[512]{0}', space=vmem, size = 0x400, scoped, tag = 'input window, operand 4, single buffered']
    #allocation11 [shape = 'u8[32768]{0}', space=vmem, size = 0x8000, scoped, tag = 'output window, operand 0']
    %10 = vsyncpa [#allocation3], 0
    %s11 = scalar_lea.sflag [#allocation3], 1
    %12 = vsyncpa %s11, 0
    %13 = vsyncpa [#allocation6], 0
    %s14 = scalar_lea.sflag [#allocation6], 1
    %15 = vsyncpa %s14, 0
    %16 = vsyncpa [#allocation9], 0
    %17 = vsyncpa [#allocation4], 0
    %s18 = scalar_lea.sflag [#allocation4], 1
    %19 = vsyncpa %s18, 0
    loop: start=0, step=1, limit=4
    $region2: #{tpu_custom_call.1} parent=1 // loop_pre_header
      _
    $region3: #{tpu_custom_call.1} parent=1 // loop_header
      %s21 = sphi 0, %s25
      %p22 = scmp.ge.s32.totalorder %s21, 4
      %s31 = sphi 0, %s33
      %s34 = sphi 0, %s31
      %s35 = sphi 0, %s34
      %s51 = sphi 0, %s35
      %s57 = sphi 0, %s59
      %s60 = sphi 0, %s57
      %s61 = sphi 0, %s60
      %s77 = sphi 0, %s61
      %s81 = sphi 0, %s81
      %s83 = sphi 0, %s81
      %s84 = sphi 0, %s83
      %s98 = sphi 0, %s84
      %s102 = sphi 0, %s102
      %s104 = sphi 0, %s102
      %s105 = sphi 0, %s104
      %s119 = sphi 0, %s105
      %s123 = sphi 0, %s123
      %s125 = sphi 0, %s123
      %s126 = sphi 0, %s125
      %s140 = sphi 0, %s126
      %s146 = sphi 0, %s148
      %s149 = sphi 0, %s146
      %s150 = sphi 0, %s149
      %s166 = sphi 0, %s150
    $region4: #{tpu_custom_call.1} parent=1 // loop_header_branch
      %24 = sbr.rel (%p22) target = $region8
    $region5: #{tpu_custom_call.1} parent=1 // loop_body
      %s26 = ssub.s32 %s21, 1
      %s27 = ssub.s32 %s21, 2
      %s28 = sadd.s32 %s21, 1
      %s29 = ssub.s32 %s21, %s28
      %p30 = scmp.eq.s32.totalorder %s29, 0
      %s32 = sadd.s32 %s31, 1
      %s33 = scalar_select %p30, %s31, %s32
      %p36 = pneg %p30
      %p37 = scmp.eq.s32.totalorder %s21, 1
      %p38 = por %p36, %p37
      %p39 = scmp.ne.s32.totalorder %s31, %s34
      %p40 = scmp.eq.s32.totalorder %s21, 0
      %p41 = por %p39, %p40
      %p42 = scmp.ne.s32.totalorder %s31, %s34
      %p43 = scmp.eq.s32.totalorder %s26, 1
      %p44 = por %p42, %p43
      %p45 = scmp.ne.s32.totalorder %s34, %s35
      %p46 = scmp.eq.s32.totalorder %s26, 0
      %p47 = por %p45, %p46
      %p48 = scmp.ne.s32.totalorder %s34, %s35
      %p49 = scmp.eq.s32.totalorder %s27, 1
      %p50 = por %p48, %p49
      %p52 = scmp.ne.s32.totalorder %s35, %s51
      %p53 = scmp.eq.s32.totalorder %s27, 0
      %p54 = por %p52, %p53
      %s55 = ssub.s32 %s21, %s28
      %p56 = scmp.eq.s32.totalorder %s55, 0
      %s58 = sadd.s32 %s57, 1
      %s59 = scalar_select %p56, %s57, %s58
      %p62 = pneg %p56
      %p63 = scmp.eq.s32.totalorder %s21, 1
      %p64 = por %p62, %p63
      %p65 = scmp.ne.s32.totalorder %s57, %s60
      %p66 = scmp.eq.s32.totalorder %s21, 0
      %p67 = por %p65, %p66
      %p68 = scmp.ne.s32.totalorder %s57, %s60
      %p69 = scmp.eq.s32.totalorder %s26, 1
      %p70 = por %p68, %p69
      %p71 = scmp.ne.s32.totalorder %s60, %s61
      %p72 = scmp.eq.s32.totalorder %s26, 0
      %p73 = por %p71, %p72
      %p74 = scmp.ne.s32.totalorder %s60, %s61
      %p75 = scmp.eq.s32.totalorder %s27, 1
      %p76 = por %p74, %p75
      %p78 = scmp.ne.s32.totalorder %s61, %s77
      %p79 = scmp.eq.s32.totalorder %s27, 0
      %p80 = por %p78, %p79
      %s82 = sadd.s32 %s81, 1
      %p85 = scmp.eq.s32.totalorder %s21, 1
      %p86 = scmp.ne.s32.totalorder %s81, %s83
      %p87 = scmp.eq.s32.totalorder %s21, 0
      %p88 = por %p86, %p87
      %p89 = scmp.ne.s32.totalorder %s81, %s83
      %p90 = scmp.eq.s32.totalorder %s26, 1
      %p91 = por %p89, %p90
      %p92 = scmp.ne.s32.totalorder %s83, %s84
      %p93 = scmp.eq.s32.totalorder %s26, 0
      %p94 = por %p92, %p93
      %p95 = scmp.ne.s32.totalorder %s83, %s84
      %p96 = scmp.eq.s32.totalorder %s27, 1
      %p97 = por %p95, %p96
      %p99 = scmp.ne.s32.totalorder %s84, %s98
      %p100 = scmp.eq.s32.totalorder %s27, 0
      %p101 = por %p99, %p100
      %s103 = sadd.s32 %s102, 1
      %p106 = scmp.eq.s32.totalorder %s21, 1
      %p107 = scmp.ne.s32.totalorder %s102, %s104
      %p108 = scmp.eq.s32.totalorder %s21, 0
      %p109 = por %p107, %p108
      %p110 = scmp.ne.s32.totalorder %s102, %s104
      %p111 = scmp.eq.s32.totalorder %s26, 1
      %p112 = por %p110, %p111
      %p113 = scmp.ne.s32.totalorder %s104, %s105
      %p114 = scmp.eq.s32.totalorder %s26, 0
      %p115 = por %p113, %p114
      %p116 = scmp.ne.s32.totalorder %s104, %s105
      %p117 = scmp.eq.s32.totalorder %s27, 1
      %p118 = por %p116, %p117
      %p120 = scmp.ne.s32.totalorder %s105, %s119
      %p121 = scmp.eq.s32.totalorder %s27, 0
      %p122 = por %p120, %p121
      %s124 = sadd.s32 %s123, 1
      %p127 = scmp.eq.s32.totalorder %s21, 1
      %p128 = scmp.ne.s32.totalorder %s123, %s125
      %p129 = scmp.eq.s32.totalorder %s21, 0
      %p130 = por %p128, %p129
      %p131 = scmp.ne.s32.totalorder %s123, %s125
      %p132 = scmp.eq.s32.totalorder %s26, 1
      %p133 = por %p131, %p132
      %p134 = scmp.ne.s32.totalorder %s125, %s126
      %p135 = scmp.eq.s32.totalorder %s26, 0
      %p136 = por %p134, %p135
      %p137 = scmp.ne.s32.totalorder %s125, %s126
      %p138 = scmp.eq.s32.totalorder %s27, 1
      %p139 = por %p137, %p138
      %p141 = scmp.ne.s32.totalorder %s126, %s140
      %p142 = scmp.eq.s32.totalorder %s27, 0
      %p143 = por %p141, %p142
      %s144 = ssub.s32 %s21, %s28
      %p145 = scmp.eq.s32.totalorder %s144, 0
      %s147 = sadd.s32 %s146, 1
      %s148 = scalar_select %p145, %s146, %s147
      %p151 = pneg %p145
      %p152 = scmp.eq.s32.totalorder %s21, 1
      %p153 = por %p151, %p152
      %p154 = scmp.ne.s32.totalorder %s146, %s149
      %p155 = scmp.eq.s32.totalorder %s21, 0
      %p156 = por %p154, %p155
      %p157 = scmp.ne.s32.totalorder %s146, %s149
      %p158 = scmp.eq.s32.totalorder %s26, 1
      %p159 = por %p157, %p158
      %p160 = scmp.ne.s32.totalorder %s149, %s150
      %p161 = scmp.eq.s32.totalorder %s26, 0
      %p162 = por %p160, %p161
      %p163 = scmp.ne.s32.totalorder %s149, %s150
      %p164 = scmp.eq.s32.totalorder %s27, 1
      %p165 = por %p163, %p164
      %p167 = scmp.ne.s32.totalorder %s150, %s166
      %p168 = scmp.eq.s32.totalorder %s27, 0
      %p169 = por %p167, %p168
      %p170 = scmp.le.s32.totalorder 1, %s21
      %p171 = scmp.lt.s32.totalorder %s21, 3
      %p172 = pnand %p170, %p171
      %p173 = pneg %p172
      // Predicated region
      $region9: #{tpu_custom_call.1} parent=5 // pred_check
        _
      $region10: #{tpu_custom_call.1} parent=5 // pred_check_branch
        %175 = sbr.rel (%p172) target = $region12
      $region11: #{tpu_custom_call.1} parent=5 // pred_region
        %s176 = ssub.s32 %s21, 1
        // Predicated region
        $region13: #{tpu_custom_call.1} parent=11 // pred_check
          %p177 = pneg %p94
        $region14: #{tpu_custom_call.1} parent=11 // pred_check_branch
          %179 = sbr.rel (%p177) target = $region16
        $region15: #{tpu_custom_call.1} parent=11 // pred_region
          %s181 = ssub.s32 512, 512
          %182 = vsyncadd [#allocation6], %s181
          %s183 = sshll.u32 [#allocation7], 4
          %s184 = int_to_ptr.vmem [resolvable:$true] %s183
          %189 = dma.hbm_to_vmem [thread:$0]  %s2, 512, %s184, [#allocation6], 128, 128, 8
        $region16: #{tpu_custom_call.1} parent=11 // pred_fallthru
          _
        // Predicated region
        $region17: #{tpu_custom_call.1} parent=11 // pred_check
          %p190 = pneg %p115
        $region18: #{tpu_custom_call.1} parent=11 // pred_check_branch
          %192 = sbr.rel (%p190) target = $region20
        $region19: #{tpu_custom_call.1} parent=11 // pred_region
          %s194 = ssub.s32 16, 16
          %195 = vsyncadd [#allocation9], %s194
          %s197 = sshll.u32 [#allocation8], 4
          %s198 = int_to_ptr.vmem [resolvable:$true] %s197
          %200 = dma.hbm_to_vmem [thread:$0]  %s3, 16, %s198, [#allocation9]
        $region20: #{tpu_custom_call.1} parent=11 // pred_fallthru
          _
        // Predicated region
        $region21: #{tpu_custom_call.1} parent=11 // pred_check
          %p201 = pneg %p136
        $region22: #{tpu_custom_call.1} parent=11 // pred_check_branch
          %203 = sbr.rel (%p201) target = $region24
        $region23: #{tpu_custom_call.1} parent=11 // pred_region
          %s205 = ssub.s32 16, 16
          %206 = vsyncadd [#allocation9], %s205
          %s208 = sshll.u32 [#allocation10], 4
          %s209 = int_to_ptr.vmem [resolvable:$true] %s208
          %211 = dma.hbm_to_vmem [thread:$0]  %s4, 16, %s209, [#allocation9]
        $region24: #{tpu_custom_call.1} parent=11 // pred_fallthru
          _
      $region12: #{tpu_custom_call.1} parent=5 // pred_fallthru
        _
      %p212 = scmp.lt.s32.totalorder %s21, 2
      // Predicated region
      $region25: #{tpu_custom_call.1} parent=5 // pred_check
        %p213 = pneg %p212
      $region26: #{tpu_custom_call.1} parent=5 // pred_check_branch
        %215 = sbr.rel (%p213) target = $region28
      $region27: #{tpu_custom_call.1} parent=5 // pred_region
        // Predicated region
        $region29: #{tpu_custom_call.1} parent=27 // pred_check
          %p216 = pneg %p41
        $region30: #{tpu_custom_call.1} parent=27 // pred_check_branch
          %218 = sbr.rel (%p216) target = $region32
        $region31: #{tpu_custom_call.1} parent=27 // pred_region
          %s219 = sand.u32 %s31, 1
          %s220 = scalar_lea.sflag [#allocation3], %s219
          %s221 = sand.u32 %s31, 1
          %s222 = smul.addr %s221, 32
          %s223 = scalar_lea.vmem [#allocation2], %s222
          %s224 = smul.u32 4, %s21
          %s226 = ssub.s32 512, 512
          %227 = vsyncadd %s220, %s226
          %s228 = smul.addr %s224, 128
          %s229 = scalar_lea.hbm %s0, %s228
          %s230 = sshll.u32 %s223, 4
          %s231 = int_to_ptr.vmem [resolvable:$true] %s230
          %236 = dma.hbm_to_vmem [thread:$0]  %s229, 512, %s231, %s220, 128, 128, 8
        $region32: #{tpu_custom_call.1} parent=27 // pred_fallthru
          _
        // Predicated region
        $region33: #{tpu_custom_call.1} parent=27 // pred_check
          %p237 = pneg %p67
        $region34: #{tpu_custom_call.1} parent=27 // pred_check_branch
          %239 = sbr.rel (%p237) target = $region36
        $region35: #{tpu_custom_call.1} parent=27 // pred_region
          %s240 = sand.u32 %s21, 1
          %s241 = scalar_lea.sflag [#allocation6], %s240
          %s242 = sand.u32 %s57, 1
          %s243 = smul.addr %s242, 32
          %s244 = scalar_lea.vmem [#allocation5], %s243
          %s245 = smul.u32 2, %s21
          %s247 = ssub.s32 512, 512
          %248 = vsyncadd %s241, %s247
          %s249 = smul.addr %s245, 2
          %s250 = smul.addr %s249, 128
          %s251 = scalar_lea.hbm %s1, %s250
          %s252 = sshll.u32 %s244, 4
          %s253 = int_to_ptr.vmem [resolvable:$true] %s252
          %258 = dma.hbm_to_vmem [thread:$0]  %s251, 512, %s253, %s241, 128, 128, 8
        $region36: #{tpu_custom_call.1} parent=27 // pred_fallthru
          _
      $region28: #{tpu_custom_call.1} parent=5 // pred_fallthru
        _
      %p259 = scmp.le.s32.totalorder 1, %s21
      %p260 = scmp.lt.s32.totalorder %s21, 3
      %p261 = pnand %p259, %p260
      %p262 = pneg %p261
      // Predicated region
      $region37: #{tpu_custom_call.1} parent=5 // pred_check
        _
      $region38: #{tpu_custom_call.1} parent=5 // pred_check_branch
        %264 = sbr.rel (%p261) target = $region40
      $region39: #{tpu_custom_call.1} parent=5 // pred_region
        %s265 = ssub.s32 %s21, 1
        %s266 = sand.u32 %s34, 1
        %s267 = scalar_lea.sflag [#allocation3], %s266
        %s268 = sand.u32 %s34, 1
        %s269 = smul.addr %s268, 32
        %s270 = scalar_lea.vmem [#allocation2], %s269
        // Predicated region
        $region41: #{tpu_custom_call.1} parent=39 // pred_check
          %p271 = pneg %p47
        $region42: #{tpu_custom_call.1} parent=39 // pred_check_branch
          %273 = sbr.rel (%p271) target = $region44
        $region43: #{tpu_custom_call.1} parent=39 // pred_region
          %274 = dma.done %s267, 512
        $region44: #{tpu_custom_call.1} parent=39 // pred_fallthru
          _
        %s275 = sand.u32 %s26, 1
        %s276 = scalar_lea.sflag [#allocation6], %s275
        %s277 = sand.u32 %s60, 1
        %s278 = smul.addr %s277, 32
        %s279 = scalar_lea.vmem [#allocation5], %s278
        // Predicated region
        $region45: #{tpu_custom_call.1} parent=39 // pred_check
          %p280 = pneg %p73
        $region46: #{tpu_custom_call.1} parent=39 // pred_check_branch
          %282 = sbr.rel (%p280) target = $region48
        $region47: #{tpu_custom_call.1} parent=39 // pred_region
          %283 = dma.done %s276, 512
        $region48: #{tpu_custom_call.1} parent=39 // pred_fallthru
          _
        // Predicated region
        $region49: #{tpu_custom_call.1} parent=39 // pred_check
          %p284 = pneg %p94
        $region50: #{tpu_custom_call.1} parent=39 // pred_check_branch
          %286 = sbr.rel (%p284) target = $region52
        $region51: #{tpu_custom_call.1} parent=39 // pred_region
          %287 = dma.done [#allocation6], 512
        $region52: #{tpu_custom_call.1} parent=39 // pred_fallthru
          _
        // Predicated region
        $region53: #{tpu_custom_call.1} parent=39 // pred_check
          %p288 = pneg %p115
        $region54: #{tpu_custom_call.1} parent=39 // pred_check_branch
          %290 = sbr.rel (%p288) target = $region56
        $region55: #{tpu_custom_call.1} parent=39 // pred_region
          %291 = dma.done [#allocation9], 16
        $region56: #{tpu_custom_call.1} parent=39 // pred_fallthru
          _
        // Predicated region
        $region57: #{tpu_custom_call.1} parent=39 // pred_check
          %p292 = pneg %p136
        $region58: #{tpu_custom_call.1} parent=39 // pred_check_branch
          %294 = sbr.rel (%p292) target = $region60
        $region59: #{tpu_custom_call.1} parent=39 // pred_region
          %295 = dma.done [#allocation9], 16
        $region60: #{tpu_custom_call.1} parent=39 // pred_fallthru
          _
        %s296 = sand.u32 %s34, 1
        %s297 = scalar_lea.sflag [#allocation3], %s296
        %s298 = sand.u32 %s34, 1
        %s299 = smul.addr %s298, 32
        %s300 = scalar_lea.vmem [#allocation2], %s299
        %p301 = pneg %p47
        %p302 = pneg %p44
        %s303 = sand.u32 %s26, 1
        %s304 = scalar_lea.sflag [#allocation6], %s303
        %s305 = sand.u32 %s60, 1
        %s306 = smul.addr %s305, 32
        %s307 = scalar_lea.vmem [#allocation5], %s306
        %p308 = pneg %p73
        %p309 = pneg %p70
        %p310 = pneg %p94
        %p311 = pneg %p91
        %p312 = pneg %p115
        %p313 = pneg %p112
        %p314 = pneg %p136
        %p315 = pneg %p133
        %p316 = pneg %p162
        %p317 = pneg %p159
        %s318 = sand.u32 %s149, 1
        %s319 = scalar_lea.sflag [#allocation4], %s318
        %s320 = sand.u32 %s149, 1
        %s321 = smul.addr %s320, 32
        %s322 = scalar_lea.vmem [#allocation11], %s321
        %s323 = smul.u32 4, %s26
        %s324 = smul.u32 2, %s26
        %s325 = smul.u32 4, %s26
        %v326 = vld [vmem:[%s270] sm:$0xff]
        %v327 = vld [vmem:[%s270 + $0x8] sm:$0xff]
        %v328 = vld [vmem:[%s270 + $0x10] sm:$0xff]
        %v329 = vld [vmem:[%s270 + $0x18] sm:$0xff]
        %v330 = vld [vmem:[#allocation7] sm:$0xff]
        %v331 = vld [vmem:[#allocation7 + $0x8] sm:$0xff]
        %v332 = vld [vmem:[#allocation7 + $0x10] sm:$0xff]
        %v333 = vld [vmem:[#allocation7 + $0x18] sm:$0xff]
        %vm334 = vcmask 261120
        %v336 = vsel %vm334, %v326, 0
        %v339 = vsel %vm334, %v327, 0
        %v342 = vsel %vm334, %v328, 0
        %v345 = vsel %vm334, %v329, 0
        %347 = vmatprep.subr.mxu0 0.0
        %348 = vmatpush1.msra.mxu0 %v330
        %349 = vmatprep.subr.mxu0 0.0
        %350 = vmatpush1.msra.mxu0 %v331
        %351 = vmatprep.subr.mxu0 0.0
        %352 = vmatpush1.msra.mxu0 %v332
        %353 = vmatprep.subr.mxu0 0.0
        %354 = vmatpush1.msra.mxu0 %v333
        %355 = vmatprep.subr.mxu0 0.0
        %356 = vmatpush1.msra.mxu0 0.0
        %357 = vmatprep.subr.mxu0 0.0
        %358 = vmatpush1.msra.mxu0 0.0
        %359 = vmatprep.subr.mxu0 0.0
        %360 = vmatpush1.msra.mxu0 0.0
        %361 = vmatprep.subr.mxu0 0.0
        %362 = vmatpush1.msra.mxu0 0.0
        %363 = vmatprep.subr.mxu0 0.0
        %364 = vmatpush1.msra.mxu0 0.0
        %365 = vmatprep.subr.mxu0 0.0
        %366 = vmatpush1.msra.mxu0 0.0
        %367 = vmatprep.subr.mxu0 0.0
        %368 = vmatpush1.msra.mxu0 0.0
        %369 = vmatprep.subr.mxu0 0.0
        %370 = vmatpush1.msra.mxu0 0.0
        %371 = vmatprep.subr.mxu0 0.0
        %372 = vmatpush1.msra.mxu0 0.0
        %373 = vmatprep.subr.mxu0 0.0
        %374 = vmatpush1.msra.mxu0 0.0
        %375 = vmatprep.subr.mxu0 0.0
        %376 = vmatpush1.msra.mxu0 0.0
        %377 = vmatprep.subr.mxu0 0.0
        %378 = vmatpush1.msra.mxu0 0.0
        %379 = vmatprep.subr.mxu0 0.0
        %380 = vmatpush1.msra.mxu0 0.0
        %381 = vmatprep.subr.mxu0 0.0
        %382 = vmatpush1.msra.mxu0 0.0
        %383 = vmatprep.subr.mxu0 0.0
        %384 = vmatpush1.msra.mxu0 0.0
        %385 = vmatprep.subr.mxu0 0.0
        %386 = vmatpush1.msra.mxu0 0.0
        %387 = vmatprep.subr.mxu0 0.0
        %388 = vmatpush1.msra.mxu0 0.0
        %389 = vmatprep.subr.mxu0 0.0
        %390 = vmatpush1.msra.mxu0 0.0
        %391 = vmatprep.subr.mxu0 0.0
        %392 = vmatpush1.msra.mxu0 0.0
        %393 = vmatprep.subr.mxu0 0.0
        %394 = vmatpush1.msra.mxu0 0.0
        %395 = vmatprep.subr.mxu0 0.0
        %396 = vmatpush1.msra.mxu0 0.0
        %397 = vmatprep.subr.mxu0 0.0
        %398 = vmatpush1.msra.mxu0 0.0
        %399 = vmatprep.subr.mxu0 0.0
        %400 = vmatpush1.msra.mxu0 0.0
        %401 = vmatprep.subr.mxu0 0.0
        %402 = vmatpush1.msra.mxu0 0.0
        %403 = vmatprep.subr.mxu0 0.0
        %404 = vmatpush1.msra.mxu0 0.0
        %405 = vmatprep.subr.mxu0 0.0
        %406 = vmatpush1.msra.mxu0 0.0
        %407 = vmatprep.subr.mxu0 0.0
        %408 = vmatpush1.msra.mxu0 0.0
        %409 = vmatprep.subr.mxu0 0.0
        %410 = vmatpush1.msra.mxu0 0.0
        %411 = vmatprep.mubr.f32.mxu0 0.0
        %412 = vmatmul.mubr.f32.gmra.mrb[0].mxu0 %v336
        %v413 = vpop.f32.mrb[0].mxu0
        %v414 = vadd.f32 0.0, %v413
        %v415 = vpop.f32.mrb[0].mxu0
        %416 = vmatprep.mubr.f32.mxu0 0.0
        %417 = vmatmul.mubr.f32.gmra.mrb[0].mxu0 %v339
        %v418 = vpop.f32.mrb[0].mxu0
        %v419 = vadd.f32 0.0, %v418
        %v420 = vpop.f32.mrb[0].mxu0
        %421 = vmatprep.mubr.f32.mxu0 0.0
        %422 = vmatmul.mubr.f32.gmra.mrb[0].mxu0 %v342
        %v423 = vpop.f32.mrb[0].mxu0
        %v424 = vadd.f32 0.0, %v423
        %v425 = vpop.f32.mrb[0].mxu0
        %426 = vmatprep.mubr.f32.mxu0 0.0
        %427 = vmatmul.mubr.f32.gmra.mrb[0].mxu0 %v345
        %v428 = vpop.f32.mrb[0].mxu0
        %v429 = vadd.f32 0.0, %v428
        %v430 = vpop.f32.mrb[0].mxu0
        %431 = vdwg.mxu0
        %v432 = vld [vmem:[#allocation10] sm:$0x1]
        %v434 = vlaneseq
        %v435 = vshrl.u32 %v434, 7
        %v436 = vsub.s32 0, %v435
        %v437 = vrot.slane %v432, %v436
        %438 = vrot.lane.b32.xlu0 %v437, 32
        %v439 = vpop.permute.xlu0 %438
        %v441 = vadd.f32 %v414, %v439
        %v442 = vadd.f32 %v419, %v439
        %v443 = vadd.f32 %v424, %v439
        %v444 = vadd.f32 %v429, %v439
        %447 = vrot.lane.b32.xlu0 %v414, 56
        %v448 = vpop.permute.xlu0 %447
        %449 = vrot.lane.b32.xlu0 %v419, 56
        %v450 = vpop.permute.xlu0 %449
        %453 = vxpose.xlu0.b32.start [1/16] %v448, 128
        %454 = vxpose.xlu0.b32.cont [2/16] %v450, 128
        %455 = vxpose.xlu0.b32.cont [3/16] 0.0, 128
        %456 = vxpose.xlu0.b32.cont [4/16] 0.0, 128
        %457 = vxpose.xlu0.b32.cont [5/16] 0.0, 128
        %458 = vxpose.xlu0.b32.cont [6/16] 0.0, 128
        %459 = vxpose.xlu0.b32.cont [7/16] 0.0, 128
        %460 = vxpose.xlu0.b32.cont [8/16] 0.0, 128
        %461 = vxpose.xlu0.b32.cont [9/16] 0.0, 128
        %462 = vxpose.xlu0.b32.cont [10/16] 0.0, 128
        %463 = vxpose.xlu0.b32.cont [11/16] 0.0, 128
        %464 = vxpose.xlu0.b32.cont [12/16] 0.0, 128
        %465 = vxpose.xlu0.b32.cont [13/16] 0.0, 128
        %466 = vxpose.xlu0.b32.cont [14/16] 0.0, 128
        %467 = vxpose.xlu0.b32.cont [15/16] 0.0, 128
        %468 = vxpose.xlu0.b32.end [16/16] 0.0, 128
        %v469 = vpop.trf.xlu0
        %v470 = vpop.trf.xlu0
        %v471 = vpop.trf.xlu0
        %v472 = vpop.trf.xlu0
        %v473 = vpop.trf.xlu0
        %v474 = vpop.trf.xlu0
        %v475 = vpop.trf.xlu0
        %v476 = vpop.trf.xlu0
        %v477 = vpop.trf.xlu0
        %v478 = vpop.trf.xlu0
        %v479 = vpop.trf.xlu0
        %v480 = vpop.trf.xlu0
        %v481 = vpop.trf.xlu0
        %v482 = vpop.trf.xlu0
        %v483 = vpop.trf.xlu0
        %v484 = vpop.trf.xlu0
        %v485 = vld [vmem:[%s279] sm:$0xff]
        %v486 = vld [vmem:[%s279 + $0x8] sm:$0xff]
        %487 = vset.pattern.permute.xlu0 64
        %488 = vperm.xlu0 %487, %v414
        %v489 = vpop.permute.xlu0 %488
        %491 = vset.pattern.permute.xlu0 64
        %492 = vperm.xlu0 %491, %v419
        %v493 = vpop.permute.xlu0 %492
        %v495 = vlaneseq
        %v496 = vshrl.u32 %v495, 7
        %v497 = vsub.s32 0, %v496
        %v498 = vrot.slane %v469, %v497
        %v499 = vadd.f32 %v489, %v498
        %v500 = vadd.f32 %v493, %v498
        %vm501 = vcmp.ge.f32.partialorder %v499, 0.0
        %vm502 = vcmp.ge.f32.partialorder %v500, 0.0
        %v503 = vmul.f32 %v499, 0.2
        %v504 = vmul.f32 %v500, 0.2
        %v505 = vsel %vm501, %v499, %v503
        %v506 = vsel %vm502, %v500, %v504
        %v507 = vtanh.pop %v505
        %v508 = vtanh.pop %v506
        %v509 = vmul.f32 %v507, 1.442695
        %v510 = vpow.pop %v509
        %v511 = vmul.f32 %v508, 1.442695
        %v512 = vpow.pop %v511
        %v513 = vmul.f32 %v510, %v485
        %v514 = vmul.f32 %v512, %v486
        %vm515 = vcmask 130048
        %v516 = vsel %vm515, %v513, 0.0
        %517 = vadd.xlane.f32.xlu0 %v516
        %v518 = vpop.xlane.xlu0 %517
        %v519 = vsel %vm515, %v514, 0.0
        %520 = vadd.xlane.f32.xlu0 %v519
        %v521 = vpop.xlane.xlu0 %520
        %v522 = vmax.f32 %v518, 1e-30
        %v523 = vmax.f32 %v521, 1e-30
        %v524 = vrcp.pop %v522
        %v525 = vrcp.pop %v523
        %v526 = vmul.f32 %v513, %v524
        %v527 = vmul.f32 %v514, %v525
        %v529 = vsel %vm515, %v526, 0
        %v532 = vsel %vm515, %v527, 0
        %534 = vmatprep.subr.mxu0 0.0
        %535 = vmatpush1.msra.mxu0 %v414
        %536 = vmatprep.subr.mxu0 0.0
        %537 = vmatpush1.msra.mxu0 %v419
        %538 = vmatprep.subr.mxu0 0.0
        %539 = vmatpush1.msra.mxu0 0.0
        %540 = vmatprep.subr.mxu0 0.0
        %541 = vmatpush1.msra.mxu0 0.0
        %542 = vmatprep.subr.mxu0 0.0
        %543 = vmatpush1.msra.mxu0 0.0
        %544 = vmatprep.subr.mxu0 0.0
        %545 = vmatpush1.msra.mxu0 0.0
        %546 = vmatprep.subr.mxu0 0.0
        %547 = vmatpush1.msra.mxu0 0.0
        %548 = vmatprep.subr.mxu0 0.0
        %549 = vmatpush1.msra.mxu0 0.0
        %550 = vmatprep.subr.mxu0 0.0
        %551 = vmatpush1.msra.mxu0 0.0
        %552 = vmatprep.subr.mxu0 0.0
        %553 = vmatpush1.msra.mxu0 0.0
        %554 = vmatprep.subr.mxu0 0.0
        %555 = vmatpush1.msra.mxu0 0.0
        %556 = vmatprep.subr.mxu0 0.0
        %557 = vmatpush1.msra.mxu0 0.0
        %558 = vmatprep.subr.mxu0 0.0
        %559 = vmatpush1.msra.mxu0 0.0
        %560 = vmatprep.subr.mxu0 0.0
        %561 = vmatpush1.msra.mxu0 0.0
        %562 = vmatprep.subr.mxu0 0.0
        %563 = vmatpush1.msra.mxu0 0.0
        %564 = vmatprep.subr.mxu0 0.0
        %565 = vmatpush1.msra.mxu0 0.0
        %566 = vmatprep.subr.mxu0 0.0
        %567 = vmatpush1.msra.mxu0 0.0
        %568 = vmatprep.subr.mxu0 0.0
        %569 = vmatpush1.msra.mxu0 0.0
        %570 = vmatprep.subr.mxu0 0.0
        %571 = vmatpush1.msra.mxu0 0.0
        %572 = vmatprep.subr.mxu0 0.0
        %573 = vmatpush1.msra.mxu0 0.0
        %574 = vmatprep.subr.mxu0 0.0
        %575 = vmatpush1.msra.mxu0 0.0
        %576 = vmatprep.subr.mxu0 0.0
        %577 = vmatpush1.msra.mxu0 0.0
        %578 = vmatprep.subr.mxu0 0.0
        %579 = vmatpush1.msra.mxu0 0.0
        %580 = vmatprep.subr.mxu0 0.0
        %581 = vmatpush1.msra.mxu0 0.0
        %582 = vmatprep.subr.mxu0 0.0
        %583 = vmatpush1.msra.mxu0 0.0
        %584 = vmatprep.subr.mxu0 0.0
        %585 = vmatpush1.msra.mxu0 0.0
        %586 = vmatprep.subr.mxu0 0.0
        %587 = vmatpush1.msra.mxu0 0.0
        %588 = vmatprep.subr.mxu0 0.0
        %589 = vmatpush1.msra.mxu0 0.0
        %590 = vmatprep.subr.mxu0 0.0
        %591 = vmatpush1.msra.mxu0 0.0
        %592 = vmatprep.subr.mxu0 0.0
        %593 = vmatpush1.msra.mxu0 0.0
        %594 = vmatprep.subr.mxu0 0.0
        %595 = vmatpush1.msra.mxu0 0.0
        %596 = vmatprep.subr.mxu0 0.0
        %597 = vmatpush1.msra.mxu0 0.0
        %598 = vmatprep.mubr.f32.mxu0 0.0
        %599 = vmatmul.mubr.f32.gmra.mrb[0].mxu0 %v529
        %v600 = vpop.f32.mrb[0].mxu0
        %v601 = vadd.f32 0.0, %v600
        %v602 = vpop.f32.mrb[0].mxu0
        %603 = vmatprep.mubr.f32.mxu0 0.0
        %604 = vmatmul.mubr.f32.gmra.mrb[0].mxu0 %v532
        %v605 = vpop.f32.mrb[0].mxu0
        %v606 = vadd.f32 0.0, %v605
        %v607 = vpop.f32.mrb[0].mxu0
        %608 = vdwg.mxu0
        %609 = vset.pattern.permute.xlu0 65
        %610 = vperm.xlu0 %609, %v414
        %v611 = vpop.permute.xlu0 %610
        %613 = vset.pattern.permute.xlu0 65
        %614 = vperm.xlu0 %613, %v419
        %v615 = vpop.permute.xlu0 %614
        %v617 = vlaneseq
        %v618 = vshrl.u32 %v617, 7
        %v619 = vsub.s32 1, %v618
        %v620 = vrot.slane %v469, %v619
        %v621 = vadd.f32 %v611, %v620
        %v622 = vadd.f32 %v615, %v620
        %vm623 = vcmp.ge.f32.partialorder %v621, 0.0
        %vm624 = vcmp.ge.f32.partialorder %v622, 0.0
        %v625 = vmul.f32 %v621, 0.2
        %v626 = vmul.f32 %v622, 0.2
        %v627 = vsel %vm623, %v621, %v625
        %v628 = vsel %vm624, %v622, %v626
        %v629 = vtanh.pop %v627
        %v630 = vtanh.pop %v628
        %v631 = vmul.f32 %v629, 1.442695
        %v632 = vpow.pop %v631
        %v633 = vmul.f32 %v630, 1.442695
        %v634 = vpow.pop %v633
        %v635 = vmul.f32 %v632, %v485
        %v636 = vmul.f32 %v634, %v486
        %v637 = vsel %vm515, %v635, 0.0
        %638 = vadd.xlane.f32.xlu0 %v637
        %v639 = vpop.xlane.xlu0 %638
        %v640 = vsel %vm515, %v636, 0.0
        %641 = vadd.xlane.f32.xlu0 %v640
        %v642 = vpop.xlane.xlu0 %641
        %v643 = vmax.f32 %v639, 1e-30
        %v644 = vmax.f32 %v642, 1e-30
        %v645 = vrcp.pop %v643
        %v646 = vrcp.pop %v644
        %v647 = vmul.f32 %v635, %v645
        %v648 = vmul.f32 %v636, %v646
        %649 = vrot.lane.b32.xlu0 %v414, 120
        %v650 = vpop.permute.xlu0 %649
        %651 = vrot.lane.b32.xlu0 %v419, 120
        %v652 = vpop.permute.xlu0 %651
        %v656 = vsel %vm515, %v647, 0
        %v659 = vsel %vm515, %v648, 0
        %661 = vmatprep.subr.mxu0 0.0
        %662 = vmatpush1.msra.mxu0 %v650
        %663 = vmatprep.subr.mxu0 0.0
        %664 = vmatpush1.msra.mxu0 %v652
        %665 = vmatprep.subr.mxu0 0.0
        %666 = vmatpush1.msra.mxu0 0.0
        %667 = vmatprep.subr.mxu0 0.0
        %668 = vmatpush1.msra.mxu0 0.0
        %669 = vmatprep.subr.mxu0 0.0
        %670 = vmatpush1.msra.mxu0 0.0
        %671 = vmatprep.subr.mxu0 0.0
        %672 = vmatpush1.msra.mxu0 0.0
        %673 = vmatprep.subr.mxu0 0.0
        %674 = vmatpush1.msra.mxu0 0.0
        %675 = vmatprep.subr.mxu0 0.0
        %676 = vmatpush1.msra.mxu0 0.0
        %677 = vmatprep.subr.mxu0 0.0
        %678 = vmatpush1.msra.mxu0 0.0
        %679 = vmatprep.subr.mxu0 0.0
        %680 = vmatpush1.msra.mxu0 0.0
        %681 = vmatprep.subr.mxu0 0.0
        %682 = vmatpush1.msra.mxu0 0.0
        %683 = vmatprep.subr.mxu0 0.0
        %684 = vmatpush1.msra.mxu0 0.0
        %685 = vmatprep.subr.mxu0 0.0
        %686 = vmatpush1.msra.mxu0 0.0
        %687 = vmatprep.subr.mxu0 0.0
        %688 = vmatpush1.msra.mxu0 0.0
        %689 = vmatprep.subr.mxu0 0.0
        %690 = vmatpush1.msra.mxu0 0.0
        %691 = vmatprep.subr.mxu0 0.0
        %692 = vmatpush1.msra.mxu0 0.0
        %693 = vmatprep.subr.mxu0 0.0
        %694 = vmatpush1.msra.mxu0 0.0
        %695 = vmatprep.subr.mxu0 0.0
        %696 = vmatpush1.msra.mxu0 0.0
        %697 = vmatprep.subr.mxu0 0.0
        %698 = vmatpush1.msra.mxu0 0.0
        %699 = vmatprep.subr.mxu0 0.0
        %700 = vmatpush1.msra.mxu0 0.0
        %701 = vmatprep.subr.mxu0 0.0
        %702 = vmatpush1.msra.mxu0 0.0
        %703 = vmatprep.subr.mxu0 0.0
        %704 = vmatpush1.msra.mxu0 0.0
        %705 = vmatprep.subr.mxu0 0.0
        %706 = vmatpush1.msra.mxu0 0.0
        %707 = vmatprep.subr.mxu0 0.0
        %708 = vmatpush1.msra.mxu0 0.0
        %709 = vmatprep.subr.mxu0 0.0
        %710 = vmatpush1.msra.mxu0 0.0
        %711 = vmatprep.subr.mxu0 0.0
        %712 = vmatpush1.msra.mxu0 0.0
        %713 = vmatprep.subr.mxu0 0.0
        %714 = vmatpush1.msra.mxu0 0.0
        %715 = vmatprep.subr.mxu0 0.0
        %716 = vmatpush1.msra.mxu0 0.0
        %717 = vmatprep.subr.mxu0 0.0
        %718 = vmatpush1.msra.mxu0 0.0
        %719 = vmatprep.subr.mxu0 0.0
        %720 = vmatpush1.msra.mxu0 0.0
        %721 = vmatprep.subr.mxu0 0.0
        %722 = vmatpush1.msra.mxu0 0.0
        %723 = vmatprep.subr.mxu0 0.0
        %724 = vmatpush1.msra.mxu0 0.0
        %725 = vmatprep.mubr.f32.mxu0 0.0
        %726 = vmatmul.mubr.f32.gmra.mrb[0].mxu0 %v656
        %v727 = vpop.f32.mrb[0].mxu0
        %v728 = vadd.f32 0.0, %v727
        %v729 = vpop.f32.mrb[0].mxu0
        %730 = vmatprep.mubr.f32.mxu0 0.0
        %731 = vmatmul.mubr.f32.gmra.mrb[0].mxu0 %v659
        %v732 = vpop.f32.mrb[0].mxu0
        %v733 = vadd.f32 0.0, %v732
        %v734 = vpop.f32.mrb[0].mxu0
        %735 = vdwg.mxu0
        %736 = vset.pattern.permute.xlu0 66
        %737 = vperm.xlu0 %736, %v414
        %v738 = vpop.permute.xlu0 %737
        %740 = vset.pattern.permute.xlu0 66
        %741 = vperm.xlu0 %740, %v419
        %v742 = vpop.permute.xlu0 %741
        %v744 = vlaneseq
        %v745 = vshrl.u32 %v744, 7
        %v746 = vsub.s32 2, %v745
        %v747 = vrot.slane %v469, %v746
        %v748 = vadd.f32 %v738, %v747
        %v749 = vadd.f32 %v742, %v747
        %vm750 = vcmp.ge.f32.partialorder %v748, 0.0
        %vm751 = vcmp.ge.f32.partialorder %v749, 0.0
        %v752 = vmul.f32 %v748, 0.2
        %v753 = vmul.f32 %v749, 0.2
        %v754 = vsel %vm750, %v748, %v752
        %v755 = vsel %vm751, %v749, %v753
        %v756 = vtanh.pop %v754
        %v757 = vtanh.pop %v755
        %v758 = vmul.f32 %v756, 1.442695
        %v759 = vpow.pop %v758
        %v760 = vmul.f32 %v757, 1.442695
        %v761 = vpow.pop %v760
        %v762 = vmul.f32 %v759, %v485
        %v763 = vmul.f32 %v761, %v486
        %v764 = vsel %vm515, %v762, 0.0
        %765 = vadd.xlane.f32.xlu0 %v764
        %v766 = vpop.xlane.xlu0 %765
        %v767 = vsel %vm515, %v763, 0.0
        %768 = vadd.xlane.f32.xlu0 %v767
        %v769 = vpop.xlane.xlu0 %768
        %v770 = vmax.f32 %v766, 1e-30
        %v771 = vmax.f32 %v769, 1e-30
        %v772 = vrcp.pop %v770
        %v773 = vrcp.pop %v771
        %v774 = vmul.f32 %v762, %v772
        %v775 = vmul.f32 %v763, %v773
        %776 = vrot.lane.b32.xlu0 %v414, 112
        %v777 = vpop.permute.xlu0 %776
        %778 = vrot.lane.b32.xlu0 %v419, 112
        %v779 = vpop.permute.xlu0 %778
        %v783 = vsel %vm515, %v774, 0
        %v786 = vsel %vm515, %v775, 0
        %788 = vmatprep.subr.mxu0 0.0
        %789 = vmatpush1.msra.mxu0 %v777
        %790 = vmatprep.subr.mxu0 0.0
        %791 = vmatpush1.msra.mxu0 %v779
        %792 = vmatprep.subr.mxu0 0.0
        %793 = vmatpush1.msra.mxu0 0.0
        %794 = vmatprep.subr.mxu0 0.0
        %795 = vmatpush1.msra.mxu0 0.0
        %796 = vmatprep.subr.mxu0 0.0
        %797 = vmatpush1.msra.mxu0 0.0
        %798 = vmatprep.subr.mxu0 0.0
        %799 = vmatpush1.msra.mxu0 0.0
        %800 = vmatprep.subr.mxu0 0.0
        %801 = vmatpush1.msra.mxu0 0.0
        %802 = vmatprep.subr.mxu0 0.0
        %803 = vmatpush1.msra.mxu0 0.0
        %804 = vmatprep.subr.mxu0 0.0
        %805 = vmatpush1.msra.mxu0 0.0
        %806 = vmatprep.subr.mxu0 0.0
        %807 = vmatpush1.msra.mxu0 0.0
        %808 = vmatprep.subr.mxu0 0.0
        %809 = vmatpush1.msra.mxu0 0.0
        %810 = vmatprep.subr.mxu0 0.0
        %811 = vmatpush1.msra.mxu0 0.0
        %812 = vmatprep.subr.mxu0 0.0
        %813 = vmatpush1.msra.mxu0 0.0
        %814 = vmatprep.subr.mxu0 0.0
        %815 = vmatpush1.msra.mxu0 0.0
        %816 = vmatprep.subr.mxu0 0.0
        %817 = vmatpush1.msra.mxu0 0.0
        %818 = vmatprep.subr.mxu0 0.0
        %819 = vmatpush1.msra.mxu0 0.0
        %820 = vmatprep.subr.mxu0 0.0
        %821 = vmatpush1.msra.mxu0 0.0
        %822 = vmatprep.subr.mxu0 0.0
        %823 = vmatpush1.msra.mxu0 0.0
        %824 = vmatprep.subr.mxu0 0.0
        %825 = vmatpush1.msra.mxu0 0.0
        %826 = vmatprep.subr.mxu0 0.0
        %827 = vmatpush1.msra.mxu0 0.0
        %828 = vmatprep.subr.mxu0 0.0
        %829 = vmatpush1.msra.mxu0 0.0
        %830 = vmatprep.subr.mxu0 0.0
        %831 = vmatpush1.msra.mxu0 0.0
        %832 = vmatprep.subr.mxu0 0.0
        %833 = vmatpush1.msra.mxu0 0.0
        %834 = vmatprep.subr.mxu0 0.0
        %835 = vmatpush1.msra.mxu0 0.0
        %836 = vmatprep.subr.mxu0 0.0
        %837 = vmatpush1.msra.mxu0 0.0
        %838 = vmatprep.subr.mxu0 0.0
        %839 = vmatpush1.msra.mxu0 0.0
        %840 = vmatprep.subr.mxu0 0.0
        %841 = vmatpush1.msra.mxu0 0.0
        %842 = vmatprep.subr.mxu0 0.0
        %843 = vmatpush1.msra.mxu0 0.0
        %844 = vmatprep.subr.mxu0 0.0
        %845 = vmatpush1.msra.mxu0 0.0
        %846 = vmatprep.subr.mxu0 0.0
        %847 = vmatpush1.msra.mxu0 0.0
        %848 = vmatprep.subr.mxu0 0.0
        %849 = vmatpush1.msra.mxu0 0.0
        %850 = vmatprep.subr.mxu0 0.0
        %851 = vmatpush1.msra.mxu0 0.0
        %852 = vmatprep.mubr.f32.mxu0 0.0
        %853 = vmatmul.mubr.f32.gmra.mrb[0].mxu0 %v783
        %v854 = vpop.f32.mrb[0].mxu0
        %v855 = vadd.f32 0.0, %v854
        %v856 = vpop.f32.mrb[0].mxu0
        %857 = vmatprep.mubr.f32.mxu0 0.0
        %858 = vmatmul.mubr.f32.gmra.mrb[0].mxu0 %v786
        %v859 = vpop.f32.mrb[0].mxu0
        %v860 = vadd.f32 0.0, %v859
        %v861 = vpop.f32.mrb[0].mxu0
        %862 = vdwg.mxu0
        %863 = vset.pattern.permute.xlu0 67
        %864 = vperm.xlu0 %863, %v414
        %v865 = vpop.permute.xlu0 %864
        %867 = vset.pattern.permute.xlu0 67
        %868 = vperm.xlu0 %867, %v419
        %v869 = vpop.permute.xlu0 %868
        %v871 = vlaneseq
        %v872 = vshrl.u32 %v871, 7
        %v873 = vsub.s32 3, %v872
        %v874 = vrot.slane %v469, %v873
        %v875 = vadd.f32 %v865, %v874
        %v876 = vadd.f32 %v869, %v874
        %vm877 = vcmp.ge.f32.partialorder %v875, 0.0
        %vm878 = vcmp.ge.f32.partialorder %v876, 0.0
        %v879 = vmul.f32 %v875, 0.2
        %v880 = vmul.f32 %v876, 0.2
        %v881 = vsel %vm877, %v875, %v879
        %v882 = vsel %vm878, %v876, %v880
        %v883 = vtanh.pop %v881
        %v884 = vtanh.pop %v882
        %v885 = vmul.f32 %v883, 1.442695
        %v886 = vpow.pop %v885
        %v887 = vmul.f32 %v884, 1.442695
        %v888 = vpow.pop %v887
        %v889 = vmul.f32 %v886, %v485
        %v890 = vmul.f32 %v888, %v486
        %v891 = vsel %vm515, %v889, 0.0
        %892 = vadd.xlane.f32.xlu0 %v891
        %v893 = vpop.xlane.xlu0 %892
        %v894 = vsel %vm515, %v890, 0.0
        %895 = vadd.xlane.f32.xlu0 %v894
        %v896 = vpop.xlane.xlu0 %895
        %v897 = vmax.f32 %v893, 1e-30
        %v898 = vmax.f32 %v896, 1e-30
        %v899 = vrcp.pop %v897
        %v900 = vrcp.pop %v898
        %v901 = vmul.f32 %v889, %v899
        %v902 = vmul.f32 %v890, %v900
        %903 = vrot.lane.b32.xlu0 %v414, 104
        %v904 = vpop.permute.xlu0 %903
        %905 = vrot.lane.b32.xlu0 %v419, 104
        %v906 = vpop.permute.xlu0 %905
        %v910 = vsel %vm515, %v901, 0
        %v913 = vsel %vm515, %v902, 0
        %915 = vmatprep.subr.mxu0 0.0
        %916 = vmatpush1.msra.mxu0 %v904
        %917 = vmatprep.subr.mxu0 0.0
        %918 = vmatpush1.msra.mxu0 %v906
        %919 = vmatprep.subr.mxu0 0.0
        %920 = vmatpush1.msra.mxu0 0.0
        %921 = vmatprep.subr.mxu0 0.0
        %922 = vmatpush1.msra.mxu0 0.0
        %923 = vmatprep.subr.mxu0 0.0
        %924 = vmatpush1.msra.mxu0 0.0
        %925 = vmatprep.subr.mxu0 0.0
        %926 = vmatpush1.msra.mxu0 0.0
        %927 = vmatprep.subr.mxu0 0.0
        %928 = vmatpush1.msra.mxu0 0.0
        %929 = vmatprep.subr.mxu0 0.0
        %930 = vmatpush1.msra.mxu0 0.0
        %931 = vmatprep.subr.mxu0 0.0
        %932 = vmatpush1.msra.mxu0 0.0
        %933 = vmatprep.subr.mxu0 0.0
        %934 = vmatpush1.msra.mxu0 0.0
        %935 = vmatprep.subr.mxu0 0.0
        %936 = vmatpush1.msra.mxu0 0.0
        %937 = vmatprep.subr.mxu0 0.0
        %938 = vmatpush1.msra.mxu0 0.0
        %939 = vmatprep.subr.mxu0 0.0
        %940 = vmatpush1.msra.mxu0 0.0
        %941 = vmatprep.subr.mxu0 0.0
        %942 = vmatpush1.msra.mxu0 0.0
        %943 = vmatprep.subr.mxu0 0.0
        %944 = vmatpush1.msra.mxu0 0.0
        %945 = vmatprep.subr.mxu0 0.0
        %946 = vmatpush1.msra.mxu0 0.0
        %947 = vmatprep.subr.mxu0 0.0
        %948 = vmatpush1.msra.mxu0 0.0
        %949 = vmatprep.subr.mxu0 0.0
        %950 = vmatpush1.msra.mxu0 0.0
        %951 = vmatprep.subr.mxu0 0.0
        %952 = vmatpush1.msra.mxu0 0.0
        %953 = vmatprep.subr.mxu0 0.0
        %954 = vmatpush1.msra.mxu0 0.0
        %955 = vmatprep.subr.mxu0 0.0
        %956 = vmatpush1.msra.mxu0 0.0
        %957 = vmatprep.subr.mxu0 0.0
        %958 = vmatpush1.msra.mxu0 0.0
        %959 = vmatprep.subr.mxu0 0.0
        %960 = vmatpush1.msra.mxu0 0.0
        %961 = vmatprep.subr.mxu0 0.0
        %962 = vmatpush1.msra.mxu0 0.0
        %963 = vmatprep.subr.mxu0 0.0
        %964 = vmatpush1.msra.mxu0 0.0
        %965 = vmatprep.subr.mxu0 0.0
        %966 = vmatpush1.msra.mxu0 0.0
        %967 = vmatprep.subr.mxu0 0.0
        %968 = vmatpush1.msra.mxu0 0.0
        %969 = vmatprep.subr.mxu0 0.0
        %970 = vmatpush1.msra.mxu0 0.0
        %971 = vmatprep.subr.mxu0 0.0
        %972 = vmatpush1.msra.mxu0 0.0
        %973 = vmatprep.subr.mxu0 0.0
        %974 = vmatpush1.msra.mxu0 0.0
        %975 = vmatprep.subr.mxu0 0.0
        %976 = vmatpush1.msra.mxu0 0.0
        %977 = vmatprep.subr.mxu0 0.0
        %978 = vmatpush1.msra.mxu0 0.0
        %979 = vmatprep.mubr.f32.mxu0 0.0
        %980 = vmatmul.mubr.f32.gmra.mrb[0].mxu0 %v910
        %v981 = vpop.f32.mrb[0].mxu0
        %v982 = vadd.f32 0.0, %v981
        %v983 = vpop.f32.mrb[0].mxu0
        %984 = vmatprep.mubr.f32.mxu0 0.0
        %985 = vmatmul.mubr.f32.gmra.mrb[0].mxu0 %v913
        %v986 = vpop.f32.mrb[0].mxu0
        %v987 = vadd.f32 0.0, %v986
        %v988 = vpop.f32.mrb[0].mxu0
        %989 = vdwg.mxu0
        %992 = vrot.lane.b32.xlu0 %v728, 8
        %v993 = vpop.permute.xlu0 %992
        %994 = vrot.lane.b32.xlu0 %v733, 8
        %v995 = vpop.permute.xlu0 %994
        %1000 = vrot.lane.b32.xlu0 %v855, 16
        %v1001 = vpop.permute.xlu0 %1000
        %1002 = vrot.lane.b32.xlu0 %v860, 16
        %v1003 = vpop.permute.xlu0 %1002
        %1008 = vrot.lane.b32.xlu0 %v982, 24
        %v1009 = vpop.permute.xlu0 %1008
        %1010 = vrot.lane.b32.xlu0 %v987, 24
        %v1011 = vpop.permute.xlu0 %1010
        %vm1014 = vcmask 64512
        %v1015 = vsel %vm1014, %v601, %v993
        %v1016 = vsel %vm1014, %v606, %v995
        %v1017 = vsel %vm515, %v1015, %v1001
        %v1018 = vsel %vm515, %v1016, %v1003
        %vm1019 = vcmask 195584
        %v1020 = vsel %vm1019, %v1017, %v1009
        %v1021 = vsel %vm1019, %v1018, %v1011
        %1024 = vrot.lane.b32.xlu0 %v424, 56
        %v1025 = vpop.permute.xlu0 %1024
        %1026 = vrot.lane.b32.xlu0 %v429, 56
        %v1027 = vpop.permute.xlu0 %1026
        %1030 = vxpose.xlu0.b32.start [1/16] %v1025, 128
        %1031 = vxpose.xlu0.b32.cont [2/16] %v1027, 128
        %1032 = vxpose.xlu0.b32.cont [3/16] 0.0, 128
        %1033 = vxpose.xlu0.b32.cont [4/16] 0.0, 128
        %1034 = vxpose.xlu0.b32.cont [5/16] 0.0, 128
        %1035 = vxpose.xlu0.b32.cont [6/16] 0.0, 128
        %1036 = vxpose.xlu0.b32.cont [7/16] 0.0, 128
        %1037 = vxpose.xlu0.b32.cont [8/16] 0.0, 128
        %1038 = vxpose.xlu0.b32.cont [9/16] 0.0, 128
        %1039 = vxpose.xlu0.b32.cont [10/16] 0.0, 128
        %1040 = vxpose.xlu0.b32.cont [11/16] 0.0, 128
        %1041 = vxpose.xlu0.b32.cont [12/16] 0.0, 128
        %1042 = vxpose.xlu0.b32.cont [13/16] 0.0, 128
        %1043 = vxpose.xlu0.b32.cont [14/16] 0.0, 128
        %1044 = vxpose.xlu0.b32.cont [15/16] 0.0, 128
        %1045 = vxpose.xlu0.b32.end [16/16] 0.0, 128
        %v1046 = vpop.trf.xlu0
        %v1047 = vpop.trf.xlu0
        %v1048 = vpop.trf.xlu0
        %v1049 = vpop.trf.xlu0
        %v1050 = vpop.trf.xlu0
        %v1051 = vpop.trf.xlu0
        %v1052 = vpop.trf.xlu0
        %v1053 = vpop.trf.xlu0
        %v1054 = vpop.trf.xlu0
        %v1055 = vpop.trf.xlu0
        %v1056 = vpop.trf.xlu0
        %v1057 = vpop.trf.xlu0
        %v1058 = vpop.trf.xlu0
        %v1059 = vpop.trf.xlu0
        %v1060 = vpop.trf.xlu0
        %v1061 = vpop.trf.xlu0
        %s1062 = scalar_lea.vmem %s279, 16 [#allocation5]
        %v1063 = vld [vmem:[%s1062] sm:$0xff]
        %v1064 = vld [vmem:[%s1062 + $0x8] sm:$0xff]
        %1065 = vset.pattern.permute.xlu0 64
        %1066 = vperm.xlu0 %1065, %v424
        %v1067 = vpop.permute.xlu0 %1066
        %1069 = vset.pattern.permute.xlu0 64
        %1070 = vperm.xlu0 %1069, %v429
        %v1071 = vpop.permute.xlu0 %1070
        %v1073 = vlaneseq
        %v1074 = vshrl.u32 %v1073, 7
        %v1075 = vsub.s32 0, %v1074
        %v1076 = vrot.slane %v1046, %v1075
        %v1077 = vadd.f32 %v1067, %v1076
        %v1078 = vadd.f32 %v1071, %v1076
        %vm1079 = vcmp.ge.f32.partialorder %v1077, 0.0
        %vm1080 = vcmp.ge.f32.partialorder %v1078, 0.0
        %v1081 = vmul.f32 %v1077, 0.2
        %v1082 = vmul.f32 %v1078, 0.2
        %v1083 = vsel %vm1079, %v1077, %v1081
        %v1084 = vsel %vm1080, %v1078, %v1082
        %v1085 = vtanh.pop %v1083
        %v1086 = vtanh.pop %v1084
        %v1087 = vmul.f32 %v1085, 1.442695
        %v1088 = vpow.pop %v1087
        %v1089 = vmul.f32 %v1086, 1.442695
        %v1090 = vpow.pop %v1089
        %v1091 = vmul.f32 %v1088, %v1063
        %v1092 = vmul.f32 %v1090, %v1064
        %v1093 = vsel %vm515, %v1091, 0.0
        %1094 = vadd.xlane.f32.xlu0 %v1093
        %v1095 = vpop.xlane.xlu0 %1094
        %v1096 = vsel %vm515, %v1092, 0.0
        %1097 = vadd.xlane.f32.xlu0 %v1096
        %v1098 = vpop.xlane.xlu0 %1097
        %v1099 = vmax.f32 %v1095, 1e-30
        %v1100 = vmax.f32 %v1098, 1e-30
        %v1101 = vrcp.pop %v1099
        %v1102 = vrcp.pop %v1100
        %v1103 = vmul.f32 %v1091, %v1101
        %v1104 = vmul.f32 %v1092, %v1102
        %v1106 = vsel %vm515, %v1103, 0
        %v1109 = vsel %vm515, %v1104, 0
        %1111 = vmatprep.subr.mxu0 0.0
        %1112 = vmatpush1.msra.mxu0 %v424
        %1113 = vmatprep.subr.mxu0 0.0
        %1114 = vmatpush1.msra.mxu0 %v429
        %1115 = vmatprep.subr.mxu0 0.0
        %1116 = vmatpush1.msra.mxu0 0.0
        %1117 = vmatprep.subr.mxu0 0.0
        %1118 = vmatpush1.msra.mxu0 0.0
        %1119 = vmatprep.subr.mxu0 0.0
        %1120 = vmatpush1.msra.mxu0 0.0
        %1121 = vmatprep.subr.mxu0 0.0
        %1122 = vmatpush1.msra.mxu0 0.0
        %1123 = vmatprep.subr.mxu0 0.0
        %1124 = vmatpush1.msra.mxu0 0.0
        %1125 = vmatprep.subr.mxu0 0.0
        %1126 = vmatpush1.msra.mxu0 0.0
        %1127 = vmatprep.subr.mxu0 0.0
        %1128 = vmatpush1.msra.mxu0 0.0
        %1129 = vmatprep.subr.mxu0 0.0
        %1130 = vmatpush1.msra.mxu0 0.0
        %1131 = vmatprep.subr.mxu0 0.0
        %1132 = vmatpush1.msra.mxu0 0.0
        %1133 = vmatprep.subr.mxu0 0.0
        %1134 = vmatpush1.msra.mxu0 0.0
        %1135 = vmatprep.subr.mxu0 0.0
        %1136 = vmatpush1.msra.mxu0 0.0
        %1137 = vmatprep.subr.mxu0 0.0
        %1138 = vmatpush1.msra.mxu0 0.0
        %1139 = vmatprep.subr.mxu0 0.0
        %1140 = vmatpush1.msra.mxu0 0.0
        %1141 = vmatprep.subr.mxu0 0.0
        %1142 = vmatpush1.msra.mxu0 0.0
        %1143 = vmatprep.subr.mxu0 0.0
        %1144 = vmatpush1.msra.mxu0 0.0
        %1145 = vmatprep.subr.mxu0 0.0
        %1146 = vmatpush1.msra.mxu0 0.0
        %1147 = vmatprep.subr.mxu0 0.0
        %1148 = vmatpush1.msra.mxu0 0.0
        %1149 = vmatprep.subr.mxu0 0.0
        %1150 = vmatpush1.msra.mxu0 0.0
        %1151 = vmatprep.subr.mxu0 0.0
        %1152 = vmatpush1.msra.mxu0 0.0
        %1153 = vmatprep.subr.mxu0 0.0
        %1154 = vmatpush1.msra.mxu0 0.0
        %1155 = vmatprep.subr.mxu0 0.0
        %1156 = vmatpush1.msra.mxu0 0.0
        %1157 = vmatprep.subr.mxu0 0.0
        %1158 = vmatpush1.msra.mxu0 0.0
        %1159 = vmatprep.subr.mxu0 0.0
        %1160 = vmatpush1.msra.mxu0 0.0
        %1161 = vmatprep.subr.mxu0 0.0
        %1162 = vmatpush1.msra.mxu0 0.0
        %1163 = vmatprep.subr.mxu0 0.0
        %1164 = vmatpush1.msra.mxu0 0.0
        %1165 = vmatprep.subr.mxu0 0.0
        %1166 = vmatpush1.msra.mxu0 0.0
        %1167 = vmatprep.subr.mxu0 0.0
        %1168 = vmatpush1.msra.mxu0 0.0
        %1169 = vmatprep.subr.mxu0 0.0
        %1170 = vmatpush1.msra.mxu0 0.0
        %1171 = vmatprep.subr.mxu0 0.0
        %1172 = vmatpush1.msra.mxu0 0.0
        %1173 = vmatprep.subr.mxu0 0.0
        %1174 = vmatpush1.msra.mxu0 0.0
        %1175 = vmatprep.mubr.f32.mxu0 0.0
        %1176 = vmatmul.mubr.f32.gmra.mrb[0].mxu0 %v1106
        %v1177 = vpop.f32.mrb[0].mxu0
        %v1178 = vadd.f32 0.0, %v1177
        %v1179 = vpop.f32.mrb[0].mxu0
        %1180 = vmatprep.mubr.f32.mxu0 0.0
        %1181 = vmatmul.mubr.f32.gmra.mrb[0].mxu0 %v1109
        %v1182 = vpop.f32.mrb[0].mxu0
        %v1183 = vadd.f32 0.0, %v1182
        %v1184 = vpop.f32.mrb[0].mxu0
        %1185 = vdwg.mxu0
        %1186 = vset.pattern.permute.xlu0 65
        %1187 = vperm.xlu0 %1186, %v424
        %v1188 = vpop.permute.xlu0 %1187
        %1190 = vset.pattern.permute.xlu0 65
        %1191 = vperm.xlu0 %1190, %v429
        %v1192 = vpop.permute.xlu0 %1191
        %v1194 = vlaneseq
        %v1195 = vshrl.u32 %v1194, 7
        %v1196 = vsub.s32 1, %v1195
        %v1197 = vrot.slane %v1046, %v1196
        %v1198 = vadd.f32 %v1188, %v1197
        %v1199 = vadd.f32 %v1192, %v1197
        %vm1200 = vcmp.ge.f32.partialorder %v1198, 0.0
        %vm1201 = vcmp.ge.f32.partialorder %v1199, 0.0
        %v1202 = vmul.f32 %v1198, 0.2
        %v1203 = vmul.f32 %v1199, 0.2
        %v1204 = vsel %vm1200, %v1198, %v1202
        %v1205 = vsel %vm1201, %v1199, %v1203
        %v1206 = vtanh.pop %v1204
        %v1207 = vtanh.pop %v1205
        %v1208 = vmul.f32 %v1206, 1.442695
        %v1209 = vpow.pop %v1208
        %v1210 = vmul.f32 %v1207, 1.442695
        %v1211 = vpow.pop %v1210
        %v1212 = vmul.f32 %v1209, %v1063
        %v1213 = vmul.f32 %v1211, %v1064
        %v1214 = vsel %vm515, %v1212, 0.0
        %1215 = vadd.xlane.f32.xlu0 %v1214
        %v1216 = vpop.xlane.xlu0 %1215
        %v1217 = vsel %vm515, %v1213, 0.0
        %1218 = vadd.xlane.f32.xlu0 %v1217
        %v1219 = vpop.xlane.xlu0 %1218
        %v1220 = vmax.f32 %v1216, 1e-30
        %v1221 = vmax.f32 %v1219, 1e-30
        %v1222 = vrcp.pop %v1220
        %v1223 = vrcp.pop %v1221
        %v1224 = vmul.f32 %v1212, %v1222
        %v1225 = vmul.f32 %v1213, %v1223
        %1226 = vrot.lane.b32.xlu0 %v424, 120
        %v1227 = vpop.permute.xlu0 %1226
        %1228 = vrot.lane.b32.xlu0 %v429, 120
        %v1229 = vpop.permute.xlu0 %1228
        %v1233 = vsel %vm515, %v1224, 0
        %v1236 = vsel %vm515, %v1225, 0
        %1238 = vmatprep.subr.mxu0 0.0
        %1239 = vmatpush1.msra.mxu0 %v1227
        %1240 = vmatprep.subr.mxu0 0.0
        %1241 = vmatpush1.msra.mxu0 %v1229
        %1242 = vmatprep.subr.mxu0 0.0
        %1243 = vmatpush1.msra.mxu0 0.0
        %1244 = vmatprep.subr.mxu0 0.0
        %1245 = vmatpush1.msra.mxu0 0.0
        %1246 = vmatprep.subr.mxu0 0.0
        %1247 = vmatpush1.msra.mxu0 0.0
        %1248 = vmatprep.subr.mxu0 0.0
        %1249 = vmatpush1.msra.mxu0 0.0
        %1250 = vmatprep.subr.mxu0 0.0
        %1251 = vmatpush1.msra.mxu0 0.0
        %1252 = vmatprep.subr.mxu0 0.0
        %1253 = vmatpush1.msra.mxu0 0.0
        %1254 = vmatprep.subr.mxu0 0.0
        %1255 = vmatpush1.msra.mxu0 0.0
        %1256 = vmatprep.subr.mxu0 0.0
        %1257 = vmatpush1.msra.mxu0 0.0
        %1258 = vmatprep.subr.mxu0 0.0
        %1259 = vmatpush1.msra.mxu0 0.0
        %1260 = vmatprep.subr.mxu0 0.0
        %1261 = vmatpush1.msra.mxu0 0.0
        %1262 = vmatprep.subr.mxu0 0.0
        %1263 = vmatpush1.msra.mxu0 0.0
        %1264 = vmatprep.subr.mxu0 0.0
        %1265 = vmatpush1.msra.mxu0 0.0
        %1266 = vmatprep.subr.mxu0 0.0
        %1267 = vmatpush1.msra.mxu0 0.0
        %1268 = vmatprep.subr.mxu0 0.0
        %1269 = vmatpush1.msra.mxu0 0.0
        %1270 = vmatprep.subr.mxu0 0.0
        %1271 = vmatpush1.msra.mxu0 0.0
        %1272 = vmatprep.subr.mxu0 0.0
        %1273 = vmatpush1.msra.mxu0 0.0
        %1274 = vmatprep.subr.mxu0 0.0
        %1275 = vmatpush1.msra.mxu0 0.0
        %1276 = vmatprep.subr.mxu0 0.0
        %1277 = vmatpush1.msra.mxu0 0.0
        %1278 = vmatprep.subr.mxu0 0.0
        %1279 = vmatpush1.msra.mxu0 0.0
        %1280 = vmatprep.subr.mxu0 0.0
        %1281 = vmatpush1.msra.mxu0 0.0
        %1282 = vmatprep.subr.mxu0 0.0
        %1283 = vmatpush1.msra.mxu0 0.0
        %1284 = vmatprep.subr.mxu0 0.0
        %1285 = vmatpush1.msra.mxu0 0.0
        %1286 = vmatprep.subr.mxu0 0.0
        %1287 = vmatpush1.msra.mxu0 0.0
        %1288 = vmatprep.subr.mxu0 0.0
        %1289 = vmatpush1.msra.mxu0 0.0
        %1290 = vmatprep.subr.mxu0 0.0
        %1291 = vmatpush1.msra.mxu0 0.0
        %1292 = vmatprep.subr.mxu0 0.0
        %1293 = vmatpush1.msra.mxu0 0.0
        %1294 = vmatprep.subr.mxu0 0.0
        %1295 = vmatpush1.msra.mxu0 0.0
        %1296 = vmatprep.subr.mxu0 0.0
        %1297 = vmatpush1.msra.mxu0 0.0
        %1298 = vmatprep.subr.mxu0 0.0
        %1299 = vmatpush1.msra.mxu0 0.0
        %1300 = vmatprep.subr.mxu0 0.0
        %1301 = vmatpush1.msra.mxu0 0.0
        %1302 = vmatprep.mubr.f32.mxu0 0.0
        %1303 = vmatmul.mubr.f32.gmra.mrb[0].mxu0 %v1233
        %v1304 = vpop.f32.mrb[0].mxu0
        %v1305 = vadd.f32 0.0, %v1304
        %v1306 = vpop.f32.mrb[0].mxu0
        %1307 = vmatprep.mubr.f32.mxu0 0.0
        %1308 = vmatmul.mubr.f32.gmra.mrb[0].mxu0 %v1236
        %v1309 = vpop.f32.mrb[0].mxu0
        %v1310 = vadd.f32 0.0, %v1309
        %v1311 = vpop.f32.mrb[0].mxu0
        %1312 = vdwg.mxu0
        %1313 = vset.pattern.permute.xlu0 66
        %1314 = vperm.xlu0 %1313, %v424
        %v1315 = vpop.permute.xlu0 %1314
        %1317 = vset.pattern.permute.xlu0 66
        %1318 = vperm.xlu0 %1317, %v429
        %v1319 = vpop.permute.xlu0 %1318
        %v1321 = vlaneseq
        %v1322 = vshrl.u32 %v1321, 7
        %v1323 = vsub.s32 2, %v1322
        %v1324 = vrot.slane %v1046, %v1323
        %v1325 = vadd.f32 %v1315, %v1324
        %v1326 = vadd.f32 %v1319, %v1324
        %vm1327 = vcmp.ge.f32.partialorder %v1325, 0.0
        %vm1328 = vcmp.ge.f32.partialorder %v1326, 0.0
        %v1329 = vmul.f32 %v1325, 0.2
        %v1330 = vmul.f32 %v1326, 0.2
        %v1331 = vsel %vm1327, %v1325, %v1329
        %v1332 = vsel %vm1328, %v1326, %v1330
        %v1333 = vtanh.pop %v1331
        %v1334 = vtanh.pop %v1332
        %v1335 = vmul.f32 %v1333, 1.442695
        %v1336 = vpow.pop %v1335
        %v1337 = vmul.f32 %v1334, 1.442695
        %v1338 = vpow.pop %v1337
        %v1339 = vmul.f32 %v1336, %v1063
        %v1340 = vmul.f32 %v1338, %v1064
        %v1341 = vsel %vm515, %v1339, 0.0
        %1342 = vadd.xlane.f32.xlu0 %v1341
        %v1343 = vpop.xlane.xlu0 %1342
        %v1344 = vsel %vm515, %v1340, 0.0
        %1345 = vadd.xlane.f32.xlu0 %v1344
        %v1346 = vpop.xlane.xlu0 %1345
        %v1347 = vmax.f32 %v1343, 1e-30
        %v1348 = vmax.f32 %v1346, 1e-30
        %v1349 = vrcp.pop %v1347
        %v1350 = vrcp.pop %v1348
        %v1351 = vmul.f32 %v1339, %v1349
        %v1352 = vmul.f32 %v1340, %v1350
        %1353 = vrot.lane.b32.xlu0 %v424, 112
        %v1354 = vpop.permute.xlu0 %1353
        %1355 = vrot.lane.b32.xlu0 %v429, 112
        %v1356 = vpop.permute.xlu0 %1355
        %v1360 = vsel %vm515, %v1351, 0
        %v1363 = vsel %vm515, %v1352, 0
        %1365 = vmatprep.subr.mxu0 0.0
        %1366 = vmatpush1.msra.mxu0 %v1354
        %1367 = vmatprep.subr.mxu0 0.0
        %1368 = vmatpush1.msra.mxu0 %v1356
        %1369 = vmatprep.subr.mxu0 0.0
        %1370 = vmatpush1.msra.mxu0 0.0
        %1371 = vmatprep.subr.mxu0 0.0
        %1372 = vmatpush1.msra.mxu0 0.0
        %1373 = vmatprep.subr.mxu0 0.0
        %1374 = vmatpush1.msra.mxu0 0.0
        %1375 = vmatprep.subr.mxu0 0.0
        %1376 = vmatpush1.msra.mxu0 0.0
        %1377 = vmatprep.subr.mxu0 0.0
        %1378 = vmatpush1.msra.mxu0 0.0
        %1379 = vmatprep.subr.mxu0 0.0
        %1380 = vmatpush1.msra.mxu0 0.0
        %1381 = vmatprep.subr.mxu0 0.0
        %1382 = vmatpush1.msra.mxu0 0.0
        %1383 = vmatprep.subr.mxu0 0.0
        %1384 = vmatpush1.msra.mxu0 0.0
        %1385 = vmatprep.subr.mxu0 0.0
        %1386 = vmatpush1.msra.mxu0 0.0
        %1387 = vmatprep.subr.mxu0 0.0
        %1388 = vmatpush1.msra.mxu0 0.0
        %1389 = vmatprep.subr.mxu0 0.0
        %1390 = vmatpush1.msra.mxu0 0.0
        %1391 = vmatprep.subr.mxu0 0.0
        %1392 = vmatpush1.msra.mxu0 0.0
        %1393 = vmatprep.subr.mxu0 0.0
        %1394 = vmatpush1.msra.mxu0 0.0
        %1395 = vmatprep.subr.mxu0 0.0
        %1396 = vmatpush1.msra.mxu0 0.0
        %1397 = vmatprep.subr.mxu0 0.0
        %1398 = vmatpush1.msra.mxu0 0.0
        %1399 = vmatprep.subr.mxu0 0.0
        %1400 = vmatpush1.msra.mxu0 0.0
        %1401 = vmatprep.subr.mxu0 0.0
        %1402 = vmatpush1.msra.mxu0 0.0
        %1403 = vmatprep.subr.mxu0 0.0
        %1404 = vmatpush1.msra.mxu0 0.0
        %1405 = vmatprep.subr.mxu0 0.0
        %1406 = vmatpush1.msra.mxu0 0.0
        %1407 = vmatprep.subr.mxu0 0.0
        %1408 = vmatpush1.msra.mxu0 0.0
        %1409 = vmatprep.subr.mxu0 0.0
        %1410 = vmatpush1.msra.mxu0 0.0
        %1411 = vmatprep.subr.mxu0 0.0
        %1412 = vmatpush1.msra.mxu0 0.0
        %1413 = vmatprep.subr.mxu0 0.0
        %1414 = vmatpush1.msra.mxu0 0.0
        %1415 = vmatprep.subr.mxu0 0.0
        %1416 = vmatpush1.msra.mxu0 0.0
        %1417 = vmatprep.subr.mxu0 0.0
        %1418 = vmatpush1.msra.mxu0 0.0
        %1419 = vmatprep.subr.mxu0 0.0
        %1420 = vmatpush1.msra.mxu0 0.0
        %1421 = vmatprep.subr.mxu0 0.0
        %1422 = vmatpush1.msra.mxu0 0.0
        %1423 = vmatprep.subr.mxu0 0.0
        %1424 = vmatpush1.msra.mxu0 0.0
        %1425 = vmatprep.subr.mxu0 0.0
        %1426 = vmatpush1.msra.mxu0 0.0
        %1427 = vmatprep.subr.mxu0 0.0
        %1428 = vmatpush1.msra.mxu0 0.0
        %1429 = vmatprep.mubr.f32.mxu0 0.0
        %1430 = vmatmul.mubr.f32.gmra.mrb[0].mxu0 %v1360
        %v1431 = vpop.f32.mrb[0].mxu0
        %v1432 = vadd.f32 0.0, %v1431
        %v1433 = vpop.f32.mrb[0].mxu0
        %1434 = vmatprep.mubr.f32.mxu0 0.0
        %1435 = vmatmul.mubr.f32.gmra.mrb[0].mxu0 %v1363
        %v1436 = vpop.f32.mrb[0].mxu0
        %v1437 = vadd.f32 0.0, %v1436
        %v1438 = vpop.f32.mrb[0].mxu0
        %1439 = vdwg.mxu0
        %1440 = vset.pattern.permute.xlu0 67
        %1441 = vperm.xlu0 %1440, %v424
        %v1442 = vpop.permute.xlu0 %1441
        %1444 = vset.pattern.permute.xlu0 67
        %1445 = vperm.xlu0 %1444, %v429
        %v1446 = vpop.permute.xlu0 %1445
        %v1448 = vlaneseq
        %v1449 = vshrl.u32 %v1448, 7
        %v1450 = vsub.s32 3, %v1449
        %v1451 = vrot.slane %v1046, %v1450
        %v1452 = vadd.f32 %v1442, %v1451
        %v1453 = vadd.f32 %v1446, %v1451
        %vm1454 = vcmp.ge.f32.partialorder %v1452, 0.0
        %vm1455 = vcmp.ge.f32.partialorder %v1453, 0.0
        %v1456 = vmul.f32 %v1452, 0.2
        %v1457 = vmul.f32 %v1453, 0.2
        %v1458 = vsel %vm1454, %v1452, %v1456
        %v1459 = vsel %vm1455, %v1453, %v1457
        %v1460 = vtanh.pop %v1458
        %v1461 = vtanh.pop %v1459
        %v1462 = vmul.f32 %v1460, 1.442695
        %v1463 = vpow.pop %v1462
        %v1464 = vmul.f32 %v1461, 1.442695
        %v1465 = vpow.pop %v1464
        %v1466 = vmul.f32 %v1463, %v1063
        %v1467 = vmul.f32 %v1465, %v1064
        %v1468 = vsel %vm515, %v1466, 0.0
        %1469 = vadd.xlane.f32.xlu0 %v1468
        %v1470 = vpop.xlane.xlu0 %1469
        %v1471 = vsel %vm515, %v1467, 0.0
        %1472 = vadd.xlane.f32.xlu0 %v1471
        %v1473 = vpop.xlane.xlu0 %1472
        %v1474 = vmax.f32 %v1470, 1e-30
        %v1475 = vmax.f32 %v1473, 1e-30
        %v1476 = vrcp.pop %v1474
        %v1477 = vrcp.pop %v1475
        %v1478 = vmul.f32 %v1466, %v1476
        %v1479 = vmul.f32 %v1467, %v1477
        %1480 = vrot.lane.b32.xlu0 %v424, 104
        %v1481 = vpop.permute.xlu0 %1480
        %1482 = vrot.lane.b32.xlu0 %v429, 104
        %v1483 = vpop.permute.xlu0 %1482
        %v1487 = vsel %vm515, %v1478, 0
        %v1490 = vsel %vm515, %v1479, 0
        %1492 = vmatprep.subr.mxu0 0.0
        %1493 = vmatpush1.msra.mxu0 %v1481
        %1494 = vmatprep.subr.mxu0 0.0
        %1495 = vmatpush1.msra.mxu0 %v1483
        %1496 = vmatprep.subr.mxu0 0.0
        %1497 = vmatpush1.msra.mxu0 0.0
        %1498 = vmatprep.subr.mxu0 0.0
        %1499 = vmatpush1.msra.mxu0 0.0
        %1500 = vmatprep.subr.mxu0 0.0
        %1501 = vmatpush1.msra.mxu0 0.0
        %1502 = vmatprep.subr.mxu0 0.0
        %1503 = vmatpush1.msra.mxu0 0.0
        %1504 = vmatprep.subr.mxu0 0.0
        %1505 = vmatpush1.msra.mxu0 0.0
        %1506 = vmatprep.subr.mxu0 0.0
        %1507 = vmatpush1.msra.mxu0 0.0
        %1508 = vmatprep.subr.mxu0 0.0
        %1509 = vmatpush1.msra.mxu0 0.0
        %1510 = vmatprep.subr.mxu0 0.0
        %1511 = vmatpush1.msra.mxu0 0.0
        %1512 = vmatprep.subr.mxu0 0.0
        %1513 = vmatpush1.msra.mxu0 0.0
        %1514 = vmatprep.subr.mxu0 0.0
        %1515 = vmatpush1.msra.mxu0 0.0
        %1516 = vmatprep.subr.mxu0 0.0
        %1517 = vmatpush1.msra.mxu0 0.0
        %1518 = vmatprep.subr.mxu0 0.0
        %1519 = vmatpush1.msra.mxu0 0.0
        %1520 = vmatprep.subr.mxu0 0.0
        %1521 = vmatpush1.msra.mxu0 0.0
        %1522 = vmatprep.subr.mxu0 0.0
        %1523 = vmatpush1.msra.mxu0 0.0
        %1524 = vmatprep.subr.mxu0 0.0
        %1525 = vmatpush1.msra.mxu0 0.0
        %1526 = vmatprep.subr.mxu0 0.0
        %1527 = vmatpush1.msra.mxu0 0.0
        %1528 = vmatprep.subr.mxu0 0.0
        %1529 = vmatpush1.msra.mxu0 0.0
        %1530 = vmatprep.subr.mxu0 0.0
        %1531 = vmatpush1.msra.mxu0 0.0
        %1532 = vmatprep.subr.mxu0 0.0
        %1533 = vmatpush1.msra.mxu0 0.0
        %1534 = vmatprep.subr.mxu0 0.0
        %1535 = vmatpush1.msra.mxu0 0.0
        %1536 = vmatprep.subr.mxu0 0.0
        %1537 = vmatpush1.msra.mxu0 0.0
        %1538 = vmatprep.subr.mxu0 0.0
        %1539 = vmatpush1.msra.mxu0 0.0
        %1540 = vmatprep.subr.mxu0 0.0
        %1541 = vmatpush1.msra.mxu0 0.0
        %1542 = vmatprep.subr.mxu0 0.0
        %1543 = vmatpush1.msra.mxu0 0.0
        %1544 = vmatprep.subr.mxu0 0.0
        %1545 = vmatpush1.msra.mxu0 0.0
        %1546 = vmatprep.subr.mxu0 0.0
        %1547 = vmatpush1.msra.mxu0 0.0
        %1548 = vmatprep.subr.mxu0 0.0
        %1549 = vmatpush1.msra.mxu0 0.0
        %1550 = vmatprep.subr.mxu0 0.0
        %1551 = vmatpush1.msra.mxu0 0.0
        %1552 = vmatprep.subr.mxu0 0.0
        %1553 = vmatpush1.msra.mxu0 0.0
        %1554 = vmatprep.subr.mxu0 0.0
        %1555 = vmatpush1.msra.mxu0 0.0
        %1556 = vmatprep.mubr.f32.mxu0 0.0
        %1557 = vmatmul.mubr.f32.gmra.mrb[0].mxu0 %v1487
        %v1558 = vpop.f32.mrb[0].mxu0
        %v1559 = vadd.f32 0.0, %v1558
        %v1560 = vpop.f32.mrb[0].mxu0
        %1561 = vmatprep.mubr.f32.mxu0 0.0
        %1562 = vmatmul.mubr.f32.gmra.mrb[0].mxu0 %v1490
        %v1563 = vpop.f32.mrb[0].mxu0
        %v1564 = vadd.f32 0.0, %v1563
        %v1565 = vpop.f32.mrb[0].mxu0
        %1566 = vdwg.mxu0
        %1569 = vrot.lane.b32.xlu0 %v1305, 8
        %v1570 = vpop.permute.xlu0 %1569
        %1571 = vrot.lane.b32.xlu0 %v1310, 8
        %v1572 = vpop.permute.xlu0 %1571
        %1577 = vrot.lane.b32.xlu0 %v1432, 16
        %v1578 = vpop.permute.xlu0 %1577
        %1579 = vrot.lane.b32.xlu0 %v1437, 16
        %v1580 = vpop.permute.xlu0 %1579
        %1585 = vrot.lane.b32.xlu0 %v1559, 24
        %v1586 = vpop.permute.xlu0 %1585
        %1587 = vrot.lane.b32.xlu0 %v1564, 24
        %v1588 = vpop.permute.xlu0 %1587
        %v1591 = vsel %vm1014, %v1178, %v1570
        %v1592 = vsel %vm1014, %v1183, %v1572
        %v1593 = vsel %vm515, %v1591, %v1578
        %v1594 = vsel %vm515, %v1592, %v1580
        %v1595 = vsel %vm1019, %v1593, %v1586
        %v1596 = vsel %vm1019, %v1594, %v1588
        %v1597 = vld [vmem:[#allocation8] sm:$0x1]
        %v1599 = vlaneseq
        %v1600 = vshrl.u32 %v1599, 7
        %v1601 = vsub.s32 0, %v1600
        %v1602 = vrot.slane %v1597, %v1601
        %v1604 = vadd.f32 %v1020, %v1602
        %v1605 = vadd.f32 %v1021, %v1602
        %v1606 = vadd.f32 %v1595, %v1602
        %v1607 = vadd.f32 %v1596, %v1602
        %vm1608 = vcmp.gt.f32.partialorder %v1604, 0.0
        %vm1609 = vcmp.gt.f32.partialorder %v1605, 0.0
        %vm1610 = vcmp.gt.f32.partialorder %v1606, 0.0
        %vm1611 = vcmp.gt.f32.partialorder %v1607, 0.0
        %v1612 = vmul.f32 %v1604, 1.442695
        %v1613 = vpow.pop %v1612
        %v1614 = vmul.f32 %v1605, 1.442695
        %v1615 = vpow.pop %v1614
        %v1616 = vmul.f32 %v1606, 1.442695
        %v1617 = vpow.pop %v1616
        %v1618 = vmul.f32 %v1607, 1.442695
        %v1619 = vpow.pop %v1618
        %v1620 = vsub.f32 %v1613, 1.0
        %v1621 = vsub.f32 %v1615, 1.0
        %v1622 = vsub.f32 %v1617, 1.0
        %v1623 = vsub.f32 %v1619, 1.0
        %v1624 = vsel %vm1608, %v1604, %v1620
        %v1625 = vsel %vm1609, %v1605, %v1621
        %v1626 = vsel %vm1610, %v1606, %v1622
        %v1627 = vsel %vm1611, %v1607, %v1623
        %v1628 = vxor.u32 %v441, 2147483648
        %v1629 = vxor.u32 %v442, 2147483648
        %v1630 = vxor.u32 %v443, 2147483648
        %v1631 = vxor.u32 %v444, 2147483648
        %v1632 = vmul.f32 %v1628, 1.442695
        %v1633 = vpow.pop %v1632
        %v1634 = vmul.f32 %v1629, 1.442695
        %v1635 = vpow.pop %v1634
        %v1636 = vmul.f32 %v1630, 1.442695
        %v1637 = vpow.pop %v1636
        %v1638 = vmul.f32 %v1631, 1.442695
        %v1639 = vpow.pop %v1638
        %v1640 = vadd.f32 %v1633, 1.0
        %v1641 = vadd.f32 %v1635, 1.0
        %v1642 = vadd.f32 %v1637, 1.0
        %v1643 = vadd.f32 %v1639, 1.0
        %v1644 = vrcp.pop %v1640
        %v1645 = vmul.f32 1.0, %v1644
        %v1646 = vrcp.pop %v1641
        %v1647 = vmul.f32 1.0, %v1646
        %v1648 = vrcp.pop %v1642
        %v1649 = vmul.f32 1.0, %v1648
        %v1650 = vrcp.pop %v1643
        %v1651 = vmul.f32 1.0, %v1650
        %1656 = vrot.lane.b32.xlu0 %v1624, 32
        %v1657 = vpop.permute.xlu0 %1656
        %1658 = vrot.lane.b32.xlu0 %v1625, 32
        %v1659 = vpop.permute.xlu0 %1658
        %1660 = vrot.lane.b32.xlu0 %v1626, 32
        %v1661 = vpop.permute.xlu0 %1660
        %1662 = vrot.lane.b32.xlu0 %v1627, 32
        %v1663 = vpop.permute.xlu0 %1662
        %v1668 = vmul.f32 %v1645, %v1657
        %v1669 = vmul.f32 %v1647, %v1659
        %v1670 = vmul.f32 %v1649, %v1661
        %v1671 = vmul.f32 %v1651, %v1663
        %v1672 = vsub.f32 1.0, %v1645
        %v1673 = vsub.f32 1.0, %v1647
        %v1674 = vsub.f32 1.0, %v1649
        %v1675 = vsub.f32 1.0, %v1651
        %1676 = vrot.lane.b32.xlu0 %v326, 32
        %v1677 = vpop.permute.xlu0 %1676
        %1678 = vrot.lane.b32.xlu0 %v327, 32
        %v1679 = vpop.permute.xlu0 %1678
        %1680 = vrot.lane.b32.xlu0 %v328, 32
        %v1681 = vpop.permute.xlu0 %1680
        %1682 = vrot.lane.b32.xlu0 %v329, 32
        %v1683 = vpop.permute.xlu0 %1682
        %v1688 = vmul.f32 %v1672, %v1677
        %v1689 = vmul.f32 %v1673, %v1679
        %v1690 = vmul.f32 %v1674, %v1681
        %v1691 = vmul.f32 %v1675, %v1683
        %v1692 = vadd.f32 %v1668, %v1688
        %v1693 = vadd.f32 %v1669, %v1689
        %v1694 = vadd.f32 %v1670, %v1690
        %v1695 = vadd.f32 %v1671, %v1691
        %1700 = vrot.lane.b32.xlu0 %v1692, 96
        %v1701 = vpop.permute.xlu0 %1700
        %1702 = vrot.lane.b32.xlu0 %v1693, 96
        %v1703 = vpop.permute.xlu0 %1702
        %1704 = vrot.lane.b32.xlu0 %v1694, 96
        %v1705 = vpop.permute.xlu0 %1704
        %1706 = vrot.lane.b32.xlu0 %v1695, 96
        %v1707 = vpop.permute.xlu0 %1706
        %1712 = vst.msk [vmem:[%s322] sm:$0xff] %vm334, %v1701
        %1713 = vst.msk [vmem:[%s322 + $0x8] sm:$0xff] %vm334, %v1703
        %1714 = vst.msk [vmem:[%s322 + $0x10] sm:$0xff] %vm334, %v1705
        %1715 = vst.msk [vmem:[%s322 + $0x18] sm:$0xff] %vm334, %v1707
        %s1716 = sand.u32 %s149, 1
        %s1717 = scalar_lea.sflag [#allocation4], %s1716
        %s1718 = sand.u32 %s149, 1
        %s1719 = smul.addr %s1718, 32
        %s1720 = scalar_lea.vmem [#allocation11], %s1719
        // Predicated region
        $region61: #{tpu_custom_call.1} parent=39 // pred_check
          %p1721 = pneg %p159
        $region62: #{tpu_custom_call.1} parent=39 // pred_check_branch
          %1723 = sbr.rel (%p1721) target = $region64
        $region63: #{tpu_custom_call.1} parent=39 // pred_region
          %s1724 = smul.u32 4, %s26
          %s1726 = ssub.s32 512, 512
          %1727 = vsyncadd %s1717, %s1726
          %s1728 = smul.addr %s1724, 128
          %s1729 = scalar_lea.hbm %s5, %s1728
          %s1730 = sshll.u32 %s1720, 4
          %s1731 = int_to_ptr.vmem [resolvable:$true] %s1730
          %1736 = dma.vmem_to_hbm [thread:$0]  %s1731, 512, %s1729, %s1717, 128, 128, 8
        $region64: #{tpu_custom_call.1} parent=39 // pred_fallthru
          _
      $region40: #{tpu_custom_call.1} parent=5 // pred_fallthru
        _
      %p1737 = scmp.le.s32.totalorder 2, %s21
      // Predicated region
      $region65: #{tpu_custom_call.1} parent=5 // pred_check
        %p1738 = pneg %p1737
      $region66: #{tpu_custom_call.1} parent=5 // pred_check_branch
        %1740 = sbr.rel (%p1738) target = $region68
      $region67: #{tpu_custom_call.1} parent=5 // pred_region
        %s1741 = ssub.s32 %s21, 2
        // Predicated region
        $region69: #{tpu_custom_call.1} parent=67 // pred_check
          %p1742 = pneg %p165
        $region70: #{tpu_custom_call.1} parent=67 // pred_check_branch
          %1744 = sbr.rel (%p1742) target = $region72
        $region71: #{tpu_custom_call.1} parent=67 // pred_region
          %s1745 = sand.u32 %s150, 1
          %s1746 = scalar_lea.sflag [#allocation4], %s1745
          %s1747 = sand.u32 %s150, 1
          %s1748 = smul.addr %s1747, 32
          %s1749 = scalar_lea.vmem [#allocation11], %s1748
          %1750 = dma.done %s1746, 512
        $region72: #{tpu_custom_call.1} parent=67 // pred_fallthru
          _
      $region68: #{tpu_custom_call.1} parent=5 // pred_fallthru
        _
    $region6: #{tpu_custom_call.1} parent=1 // loop_footer
      %s25 = sadd.s32 1, %s21
    $region7: #{tpu_custom_call.1} parent=1 // loop_footer_branch
      %20 = sbr.rel target = $region3
    $region8: #{tpu_custom_call.1} parent=1 // loop_exit
      _
    %1751 = vsyncpa [#allocation3], 1
    %s1752 = scalar_lea.sflag [#allocation3], 1
    %1753 = vsyncpa %s1752, 1
    %1754 = vsyncpa [#allocation6], 1
    %s1755 = scalar_lea.sflag [#allocation6], 1
    %1756 = vsyncpa %s1755, 1
    %1757 = vsyncpa [#allocation9], 1
    %1758 = vsyncpa [#allocation4], 1
    %s1759 = scalar_lea.sflag [#allocation4], 1
    %1760 = vsyncpa %s1759, 1

</llo_original>
